<compile_context>
chip_gen: v7x
topology: tpu7x:2x2x1
jax: 0.10.0
libtpu: 0.0.40
codegen_flags: <defaults>
</compile_context>

<pallas_src>
import functools

import jax
import jax.numpy as jnp
from jax.experimental import pallas as pl
from jax.experimental.pallas import tpu as pltpu


def _sgn_kernel(lam,
                xr_ref, xi_ref,
                w1r_ref, w1i_ref, w1s_ref, b1r_ref, b1i_ref,
                w2r_ref, w2i_ref, w2s_ref, b2r_ref, b2i_ref,
                yr_ref, yi_ref):
    """One N-tile of the spectral gating MLP.

    xr/xi: (TN, C) real/imag of rfft2(x) rows (compute dtype).
    w1*:   (C, Cf) block-diagonal first layer (r, i, r+i).
    w2*:   (Cf, C) block-diagonal second layer (r, i, r+i).
    b*:    (1, Cf) / (1, C) biases (f32).
    yr/yi: (TN, C) gated spectrum (f32).
    """
    f32 = jnp.float32
    xr = xr_ref[...]
    xi = xi_ref[...]
    cd = xr.dtype

    def dot(a, b):
        return jnp.dot(a, b, preferred_element_type=f32)

    # ---- layer 1: complex linear via 3 real matmuls (Karatsuba) ----
    m1 = dot(xr, w1r_ref[...])
    m2 = dot(xi, w1i_ref[...])
    m3 = dot(xr + xi, w1s_ref[...])
    o1r = m1 - m2 + b1r_ref[...]
    o1i = m3 - m1 - m2 + b1i_ref[...]

    # ---- layer 2 ----
    a1r = o1r.astype(cd)
    a1i = o1i.astype(cd)
    n1 = dot(a1r, w2r_ref[...])
    n2 = dot(a1i, w2i_ref[...])
    n3 = dot(a1r + a1i, w2s_ref[...])
    o2r = n1 - n2 + b2r_ref[...]
    o2i = n3 - n1 - n2 + b2i_ref[...]

    # ---- softshrink: max(v - lam, 0) + min(v + lam, 0) (branch-free) ----
    def softshrink(v):
        return jnp.maximum(v - lam, 0.0) + jnp.minimum(v + lam, 0.0)

    sr = softshrink(o2r)
    si = softshrink(o2i)

    # ---- gate with the original FFT values (complex multiply), f32 ----
    gr = xr.astype(f32)
    gi = xi.astype(f32)
    yr_ref[...] = sr * gr - si * gi
    yi_ref[...] = sr * gi + si * gr


def _block_diag(w):
    """(nb, r, c) per-block weights -> dense block-diagonal (nb*r, nb*c)."""
    nb, r, c = w.shape
    eye = jnp.eye(nb, dtype=w.dtype)
    return (eye[:, None, :, None] * w[:, :, None, :]).reshape(nb * r, nb * c)


def _round_up(a, m):
    return ((a + m - 1) // m) * m


def spectral_gating_network(x, w1, b1, w2, b2, *, num_blocks=8,
                            sparsity_threshold=0.01, tile_rows=512,
                            compute_dtype=jnp.float32):
    """Forward pass equivalent to the PyTorch SpectralGatingNetwork.forward.

    compute_dtype: dtype of the MXU matmul inputs (use jnp.bfloat16 on
    v6e/v7x for the bf16-native MXU path; accumulation is always f32).
    """
    out_dtype = x.dtype
    bias = x
    x32 = x.astype(jnp.float32)
    B, C, H, W = x.shape
    bs = C // num_blocks
    bsf = w1.shape[-1]              # block_size * hidden_size_factor
    Cf = num_blocks * bsf

    # FFT in plain JAX (no Pallas FFT primitive on TPU).
    xf = jnp.fft.rfft2(x32, axes=(2, 3), norm='ortho')     # (B, C, H, Wf) c64
    Wf = xf.shape[-1]
    N = B * H * Wf

    # Channel-last layout: one transpose, then flatten to (N, C) rows.
    xf_t = jnp.transpose(xf, (0, 2, 3, 1))                  # (B, H, Wf, C)
    xr = jnp.real(xf_t).reshape(N, C)
    xi = jnp.imag(xf_t).reshape(N, C)

    # ---- N tiling: multiple-of-8 tiles, >=2 grid steps (dual-TC chips). ----
    n_tiles = max(1, -(-N // tile_rows))
    if n_tiles == 1 and N > 8:
        n_tiles = 2
    TN = _round_up(-(-N // n_tiles), 8)
    Np = TN * n_tiles
    pad = Np - N
    if pad:
        xr = jnp.pad(xr, ((0, pad), (0, 0)))
        xi = jnp.pad(xi, ((0, pad), (0, 0)))

    xr_c = xr.astype(compute_dtype)
    xi_c = xi.astype(compute_dtype)

    # ---- fuse block-diagonal weights into dense matrices (wrapper side). ----
    w1r = _block_diag(w1[0]).astype(compute_dtype)          # (C, Cf)
    w1i = _block_diag(w1[1]).astype(compute_dtype)
    w1s = (w1r + w1i).astype(compute_dtype)
    w2r = _block_diag(w2[0]).astype(compute_dtype)          # (Cf, C)
    w2i = _block_diag(w2[1]).astype(compute_dtype)
    w2s = (w2r + w2i).astype(compute_dtype)
    b1r = b1[0].reshape(1, Cf).astype(jnp.float32)
    b1i = b1[1].reshape(1, Cf).astype(jnp.float32)
    b2r = b2[0].reshape(1, C).astype(jnp.float32)
    b2i = b2[1].reshape(1, C).astype(jnp.float32)

    x_spec = pl.BlockSpec((TN, C), lambda i: (i, 0))
    # Constant index_maps -> weights/biases stay VMEM-resident across steps.
    w1_spec = pl.BlockSpec((C, Cf), lambda i: (0, 0))
    w2_spec = pl.BlockSpec((Cf, C), lambda i: (0, 0))
    b1_spec = pl.BlockSpec((1, Cf), lambda i: (0, 0))
    b2_spec = pl.BlockSpec((1, C), lambda i: (0, 0))

    yr_p, yi_p = pl.pallas_call(
        functools.partial(_sgn_kernel, float(sparsity_threshold)),
        out_shape=(jax.ShapeDtypeStruct((Np, C), jnp.float32),
                   jax.ShapeDtypeStruct((Np, C), jnp.float32)),
        grid_spec=pltpu.PrefetchScalarGridSpec(
            num_scalar_prefetch=0,
            grid=(n_tiles,),
            in_specs=[
                x_spec, x_spec,                      # xr, xi
                w1_spec, w1_spec, w1_spec,           # w1r, w1i, w1s
                b1_spec, b1_spec,                    # b1r, b1i
                w2_spec, w2_spec, w2_spec,           # w2r, w2i, w2s
                b2_spec, b2_spec,                    # b2r, b2i
            ],
            out_specs=[x_spec, x_spec],
        ),
        compiler_params=pltpu.CompilerParams(
            dimension_semantics=("parallel",),
            vmem_limit_bytes=32 * 1024 * 1024),
    )(xr_c, xi_c, w1r, w1i, w1s, b1r, b1i, w2r, w2i, w2s, b2r, b2i)

    # Back to (B, C, H, Wf) and inverse FFT.
    yr = yr_p[:N].reshape(B, H, Wf, C)
    yi = yi_p[:N].reshape(B, H, Wf, C)
    yf = jnp.transpose(yr + 1j * yi, (0, 3, 1, 2))          # (B, C, H, Wf)
    out = jnp.fft.irfft2(yf, s=(H, W), axes=(2, 3), norm='ortho')
    return out.astype(out_dtype) + bias


def _reference(x, w1, b1, w2, b2, *, num_blocks=8, sparsity_threshold=0.01):
    """Pure-JAX reference mirroring the PyTorch forward, for validation."""
    dtype = x.dtype
    bias = x
    x = x.astype(jnp.float32)
    B, C, H, W = x.shape
    bs = C // num_blocks
    xf = jnp.fft.rfft2(x, axes=(2, 3), norm='ortho')
    origin = xf
    xb = xf.reshape(B, num_blocks, bs, H, xf.shape[-1])
    ein = lambda a, w: jnp.einsum('bkihw,kio->bkohw', a, w)
    o1r = ein(xb.real, w1[0]) - ein(xb.imag, w1[1]) + b1[0][None, :, :, None, None]
    o1i = ein(xb.imag, w1[0]) + ein(xb.real, w1[1]) + b1[1][None, :, :, None, None]
    o2r = ein(o1r, w2[0]) - ein(o1i, w2[1]) + b2[0][None, :, :, None, None]
    o2i = ein(o1i, w2[0]) + ein(o1r, w2[1]) + b2[1][None, :, :, None, None]
    lam = float(sparsity_threshold)
    ss = lambda v: jnp.where(v > lam, v - lam, jnp.where(v < -lam, v + lam, 0.0))
    yc = (ss(o2r) + 1j * ss(o2i)).reshape(B, C, H, xf.shape[-1])
    yc = yc * origin
    out = jnp.fft.irfft2(yc, s=(H, W), axes=(2, 3), norm='ortho')
    return out.astype(dtype) + bias


if __name__ == "__main__":
    # hidden_size=64 (one of the sizes the module expects), num_blocks=8.
    B, C, H, W = 2, 64, 16, 16
    num_blocks = 8
    block_size = C // num_blocks
    hidden_size_factor = 1
    bsf = block_size * hidden_size_factor
    scale = 0.02
    sparsity_threshold = 0.01

    key = jax.random.PRNGKey(0)
    kx, k1, k2, k3, k4 = jax.random.split(key, 5)
    x = jax.random.normal(kx, (B, C, H, W), jnp.float32)
    w1 = scale * jax.random.normal(k1, (2, num_blocks, block_size, bsf), jnp.float32)
    b1 = scale * jax.random.normal(k2, (2, num_blocks, bsf), jnp.float32)
    w2 = scale * jax.random.normal(k3, (2, num_blocks, bsf, block_size), jnp.float32)
    b2 = scale * jax.random.normal(k4, (2, num_blocks, block_size), jnp.float32)

    ref = _reference(
        x, w1, b1, w2, b2,
        num_blocks=num_blocks, sparsity_threshold=sparsity_threshold)

    # Exact-semantics f32 path.
    out_f32 = spectral_gating_network(
        x, w1, b1, w2, b2,
        num_blocks=num_blocks, sparsity_threshold=sparsity_threshold,
        compute_dtype=jnp.float32)
    out_f32 = jax.block_until_ready(out_f32)
    assert out_f32.shape == (B, C, H, W)
    assert jnp.allclose(out_f32, ref, atol=1e-4, rtol=1e-4), "f32 mismatch vs reference"

    # bf16 MXU-input path (v6e/v7x native precision), f32 accumulation.
    out_bf16 = spectral_gating_network(
        x, w1, b1, w2, b2,
        num_blocks=num_blocks, sparsity_threshold=sparsity_threshold,
        compute_dtype=jnp.bfloat16)
    out_bf16 = jax.block_until_ready(out_bf16)
    assert jnp.allclose(out_bf16, ref, atol=3e-3, rtol=3e-3), "bf16 mismatch vs reference"

    print("KERNEL_OK")
</pallas_src>

<mosaic_0001>
module attributes {stable_mosaic.version = 11 : i64} {
  func.func @_sgn_kernel(%arg0: i32, %arg1: memref<144x64xf32, #tpu.memory_space<vmem>>, %arg2: memref<144x64xf32, #tpu.memory_space<vmem>>, %arg3: memref<64x64xf32, #tpu.memory_space<vmem>>, %arg4: memref<64x64xf32, #tpu.memory_space<vmem>>, %arg5: memref<64x64xf32, #tpu.memory_space<vmem>>, %arg6: memref<1x64xf32, #tpu.memory_space<vmem>>, %arg7: memref<1x64xf32, #tpu.memory_space<vmem>>, %arg8: memref<64x64xf32, #tpu.memory_space<vmem>>, %arg9: memref<64x64xf32, #tpu.memory_space<vmem>>, %arg10: memref<64x64xf32, #tpu.memory_space<vmem>>, %arg11: memref<1x64xf32, #tpu.memory_space<vmem>>, %arg12: memref<1x64xf32, #tpu.memory_space<vmem>>, %arg13: memref<144x64xf32, #tpu.memory_space<vmem>>, %arg14: memref<144x64xf32, #tpu.memory_space<vmem>>) attributes {dimension_semantics = [#tpu.dimension_semantics<parallel>], iteration_bounds = array<i64: 2>, scalar_prefetch = 0 : i64, scratch_operands = 0 : i64, tpu.core_type = #tpu.core_type<tc>, window_params = [{transform_indices = @transform_0, window_bounds = array<i64: 144, 64>}, {transform_indices = @transform_1, window_bounds = array<i64: 144, 64>}, {pipeline_mode = #tpu.pipeline_mode<synchronous>, transform_indices = @transform_2, window_bounds = array<i64: 64, 64>}, {pipeline_mode = #tpu.pipeline_mode<synchronous>, transform_indices = @transform_3, window_bounds = array<i64: 64, 64>}, {pipeline_mode = #tpu.pipeline_mode<synchronous>, transform_indices = @transform_4, window_bounds = array<i64: 64, 64>}, {pipeline_mode = #tpu.pipeline_mode<synchronous>, transform_indices = @transform_5, window_bounds = array<i64: 1, 64>}, {pipeline_mode = #tpu.pipeline_mode<synchronous>, transform_indices = @transform_6, window_bounds = array<i64: 1, 64>}, {pipeline_mode = #tpu.pipeline_mode<synchronous>, transform_indices = @transform_7, window_bounds = array<i64: 64, 64>}, {pipeline_mode = #tpu.pipeline_mode<synchronous>, transform_indices = @transform_8, window_bounds = array<i64: 64, 64>}, {pipeline_mode = #tpu.pipeline_mode<synchronous>, transform_indices = @transform_9, window_bounds = array<i64: 64, 64>}, {pipeline_mode = #tpu.pipeline_mode<synchronous>, transform_indices = @transform_10, window_bounds = array<i64: 1, 64>}, {pipeline_mode = #tpu.pipeline_mode<synchronous>, transform_indices = @transform_11, window_bounds = array<i64: 1, 64>}, {transform_indices = @transform_12, window_bounds = array<i64: 144, 64>}, {transform_indices = @transform_13, window_bounds = array<i64: 144, 64>}]} {
    %c0 = arith.constant 0 : index
    %c0_0 = arith.constant 0 : index
    %0 = vector.load %arg1[%c0, %c0_0] : memref<144x64xf32, #tpu.memory_space<vmem>>, vector<144x64xf32>
    %c0_1 = arith.constant 0 : index
    %c0_2 = arith.constant 0 : index
    %1 = vector.load %arg2[%c0_1, %c0_2] : memref<144x64xf32, #tpu.memory_space<vmem>>, vector<144x64xf32>
    %c0_3 = arith.constant 0 : index
    %c0_4 = arith.constant 0 : index
    %2 = vector.load %arg3[%c0_3, %c0_4] : memref<64x64xf32, #tpu.memory_space<vmem>>, vector<64x64xf32>
    %cst = arith.constant dense<0.000000e+00> : vector<144x64xf32>
    %3 = tpu.matmul %0, %2, %cst {dimension_numbers = #tpu.dot_dimension_numbers<[1], [0], [0], [1], [0, 0, 1, 1], [], []>} : vector<144x64xf32>, vector<64x64xf32>, vector<144x64xf32> -> vector<144x64xf32>
    %c0_5 = arith.constant 0 : index
    %c0_6 = arith.constant 0 : index
    %4 = vector.load %arg4[%c0_5, %c0_6] : memref<64x64xf32, #tpu.memory_space<vmem>>, vector<64x64xf32>
    %cst_7 = arith.constant dense<0.000000e+00> : vector<144x64xf32>
    %5 = tpu.matmul %1, %4, %cst_7 {dimension_numbers = #tpu.dot_dimension_numbers<[1], [0], [0], [1], [0, 0, 1, 1], [], []>} : vector<144x64xf32>, vector<64x64xf32>, vector<144x64xf32> -> vector<144x64xf32>
    %6 = arith.addf %0, %1 : vector<144x64xf32>
    %c0_8 = arith.constant 0 : index
    %c0_9 = arith.constant 0 : index
    %7 = vector.load %arg5[%c0_8, %c0_9] : memref<64x64xf32, #tpu.memory_space<vmem>>, vector<64x64xf32>
    %cst_10 = arith.constant dense<0.000000e+00> : vector<144x64xf32>
    %8 = tpu.matmul %6, %7, %cst_10 {dimension_numbers = #tpu.dot_dimension_numbers<[1], [0], [0], [1], [0, 0, 1, 1], [], []>} : vector<144x64xf32>, vector<64x64xf32>, vector<144x64xf32> -> vector<144x64xf32>
    %9 = arith.subf %3, %5 : vector<144x64xf32>
    %c0_11 = arith.constant 0 : index
    %c0_12 = arith.constant 0 : index
    %10 = vector.load %arg6[%c0_11, %c0_12] : memref<1x64xf32, #tpu.memory_space<vmem>>, vector<1x64xf32>
    %11 = vector.broadcast %10 : vector<1x64xf32> to vector<144x64xf32>
    %12 = arith.addf %9, %11 : vector<144x64xf32>
    %13 = arith.subf %8, %3 : vector<144x64xf32>
    %14 = arith.subf %13, %5 : vector<144x64xf32>
    %c0_13 = arith.constant 0 : index
    %c0_14 = arith.constant 0 : index
    %15 = vector.load %arg7[%c0_13, %c0_14] : memref<1x64xf32, #tpu.memory_space<vmem>>, vector<1x64xf32>
    %16 = vector.broadcast %15 : vector<1x64xf32> to vector<144x64xf32>
    %17 = arith.addf %14, %16 : vector<144x64xf32>
    %c0_15 = arith.constant 0 : index
    %c0_16 = arith.constant 0 : index
    %18 = vector.load %arg8[%c0_15, %c0_16] : memref<64x64xf32, #tpu.memory_space<vmem>>, vector<64x64xf32>
    %cst_17 = arith.constant dense<0.000000e+00> : vector<144x64xf32>
    %19 = tpu.matmul %12, %18, %cst_17 {dimension_numbers = #tpu.dot_dimension_numbers<[1], [0], [0], [1], [0, 0, 1, 1], [], []>} : vector<144x64xf32>, vector<64x64xf32>, vector<144x64xf32> -> vector<144x64xf32>
    %c0_18 = arith.constant 0 : index
    %c0_19 = arith.constant 0 : index
    %20 = vector.load %arg9[%c0_18, %c0_19] : memref<64x64xf32, #tpu.memory_space<vmem>>, vector<64x64xf32>
    %cst_20 = arith.constant dense<0.000000e+00> : vector<144x64xf32>
    %21 = tpu.matmul %17, %20, %cst_20 {dimension_numbers = #tpu.dot_dimension_numbers<[1], [0], [0], [1], [0, 0, 1, 1], [], []>} : vector<144x64xf32>, vector<64x64xf32>, vector<144x64xf32> -> vector<144x64xf32>
    %22 = arith.addf %12, %17 : vector<144x64xf32>
    %c0_21 = arith.constant 0 : index
    %c0_22 = arith.constant 0 : index
    %23 = vector.load %arg10[%c0_21, %c0_22] : memref<64x64xf32, #tpu.memory_space<vmem>>, vector<64x64xf32>
    %cst_23 = arith.constant dense<0.000000e+00> : vector<144x64xf32>
    %24 = tpu.matmul %22, %23, %cst_23 {dimension_numbers = #tpu.dot_dimension_numbers<[1], [0], [0], [1], [0, 0, 1, 1], [], []>} : vector<144x64xf32>, vector<64x64xf32>, vector<144x64xf32> -> vector<144x64xf32>
    %25 = arith.subf %19, %21 : vector<144x64xf32>
    %c0_24 = arith.constant 0 : index
    %c0_25 = arith.constant 0 : index
    %26 = vector.load %arg11[%c0_24, %c0_25] : memref<1x64xf32, #tpu.memory_space<vmem>>, vector<1x64xf32>
    %27 = vector.broadcast %26 : vector<1x64xf32> to vector<144x64xf32>
    %28 = arith.addf %25, %27 : vector<144x64xf32>
    %29 = arith.subf %24, %19 : vector<144x64xf32>
    %30 = arith.subf %29, %21 : vector<144x64xf32>
    %c0_26 = arith.constant 0 : index
    %c0_27 = arith.constant 0 : index
    %31 = vector.load %arg12[%c0_26, %c0_27] : memref<1x64xf32, #tpu.memory_space<vmem>>, vector<1x64xf32>
    %32 = vector.broadcast %31 : vector<1x64xf32> to vector<144x64xf32>
    %33 = arith.addf %30, %32 : vector<144x64xf32>
    %cst_28 = arith.constant 0.00999999977 : f32
    %34 = vector.broadcast %cst_28 : f32 to vector<144x64xf32>
    %35 = arith.subf %28, %34 : vector<144x64xf32>
    %cst_29 = arith.constant 0.000000e+00 : f32
    %36 = vector.broadcast %cst_29 : f32 to vector<144x64xf32>
    %37 = arith.maximumf %35, %36 : vector<144x64xf32>
    %cst_30 = arith.constant 0.00999999977 : f32
    %38 = vector.broadcast %cst_30 : f32 to vector<144x64xf32>
    %39 = arith.addf %28, %38 : vector<144x64xf32>
    %cst_31 = arith.constant 0.000000e+00 : f32
    %40 = vector.broadcast %cst_31 : f32 to vector<144x64xf32>
    %41 = arith.minimumf %39, %40 : vector<144x64xf32>
    %42 = arith.addf %37, %41 : vector<144x64xf32>
    %cst_32 = arith.constant 0.00999999977 : f32
    %43 = vector.broadcast %cst_32 : f32 to vector<144x64xf32>
    %44 = arith.subf %33, %43 : vector<144x64xf32>
    %cst_33 = arith.constant 0.000000e+00 : f32
    %45 = vector.broadcast %cst_33 : f32 to vector<144x64xf32>
    %46 = arith.maximumf %44, %45 : vector<144x64xf32>
    %cst_34 = arith.constant 0.00999999977 : f32
    %47 = vector.broadcast %cst_34 : f32 to vector<144x64xf32>
    %48 = arith.addf %33, %47 : vector<144x64xf32>
    %cst_35 = arith.constant 0.000000e+00 : f32
    %49 = vector.broadcast %cst_35 : f32 to vector<144x64xf32>
    %50 = arith.minimumf %48, %49 : vector<144x64xf32>
    %51 = arith.addf %46, %50 : vector<144x64xf32>
    %52 = arith.mulf %42, %0 : vector<144x64xf32>
    %53 = arith.mulf %51, %1 : vector<144x64xf32>
    %54 = arith.subf %52, %53 : vector<144x64xf32>
    %c0_36 = arith.constant 0 : index
    %c0_37 = arith.constant 0 : index
    %55 = vector.load %arg13[%c0_36, %c0_37] : memref<144x64xf32, #tpu.memory_space<vmem>>, vector<144x64xf32>
    tpu.vector_store %arg13[%c0_36, %c0_37], %54 {strides = array<i32>} : memref<144x64xf32, #tpu.memory_space<vmem>>, vector<144x64xf32>,
    %56 = arith.mulf %42, %1 : vector<144x64xf32>
    %57 = arith.mulf %51, %0 : vector<144x64xf32>
    %58 = arith.addf %56, %57 : vector<144x64xf32>
    %c0_38 = arith.constant 0 : index
    %c0_39 = arith.constant 0 : index
    %59 = vector.load %arg14[%c0_38, %c0_39] : memref<144x64xf32, #tpu.memory_space<vmem>>, vector<144x64xf32>
    tpu.vector_store %arg14[%c0_38, %c0_39], %58 {strides = array<i32>} : memref<144x64xf32, #tpu.memory_space<vmem>>, vector<144x64xf32>,
    return
  }
  func.func @transform_0(%arg0: i32) -> (i32, i32) {
    %c0_i32 = arith.constant 0 : i32
    %c0_i32_0 = arith.constant 0 : i32
    return %arg0, %c0_i32 : i32, i32
  }
  func.func @transform_1(%arg0: i32) -> (i32, i32) {
    %c0_i32 = arith.constant 0 : i32
    %c0_i32_0 = arith.constant 0 : i32
    return %arg0, %c0_i32 : i32, i32
  }
  func.func @transform_2(%arg0: i32) -> (i32, i32) {
    %c0_i32 = arith.constant 0 : i32
    %c0_i32_0 = arith.constant 0 : i32
    %c0_i32_1 = arith.constant 0 : i32
    return %c0_i32, %c0_i32_0 : i32, i32
  }
  func.func @transform_3(%arg0: i32) -> (i32, i32) {
    %c0_i32 = arith.constant 0 : i32
    %c0_i32_0 = arith.constant 0 : i32
    %c0_i32_1 = arith.constant 0 : i32
    return %c0_i32, %c0_i32_0 : i32, i32
  }
  func.func @transform_4(%arg0: i32) -> (i32, i32) {
    %c0_i32 = arith.constant 0 : i32
    %c0_i32_0 = arith.constant 0 : i32
    %c0_i32_1 = arith.constant 0 : i32
    return %c0_i32, %c0_i32_0 : i32, i32
  }
  func.func @transform_5(%arg0: i32) -> (i32, i32) {
    %c0_i32 = arith.constant 0 : i32
    %c0_i32_0 = arith.constant 0 : i32
    %c0_i32_1 = arith.constant 0 : i32
    return %c0_i32, %c0_i32_0 : i32, i32
  }
  func.func @transform_6(%arg0: i32) -> (i32, i32) {
    %c0_i32 = arith.constant 0 : i32
    %c0_i32_0 = arith.constant 0 : i32
    %c0_i32_1 = arith.constant 0 : i32
    return %c0_i32, %c0_i32_0 : i32, i32
  }
  func.func @transform_7(%arg0: i32) -> (i32, i32) {
    %c0_i32 = arith.constant 0 : i32
    %c0_i32_0 = arith.constant 0 : i32
    %c0_i32_1 = arith.constant 0 : i32
    return %c0_i32, %c0_i32_0 : i32, i32
  }
  func.func @transform_8(%arg0: i32) -> (i32, i32) {
    %c0_i32 = arith.constant 0 : i32
    %c0_i32_0 = arith.constant 0 : i32
    %c0_i32_1 = arith.constant 0 : i32
    return %c0_i32, %c0_i32_0 : i32, i32
  }
  func.func @transform_9(%arg0: i32) -> (i32, i32) {
    %c0_i32 = arith.constant 0 : i32
    %c0_i32_0 = arith.constant 0 : i32
    %c0_i32_1 = arith.constant 0 : i32
    return %c0_i32, %c0_i32_0 : i32, i32
  }
  func.func @transform_10(%arg0: i32) -> (i32, i32) {
    %c0_i32 = arith.constant 0 : i32
    %c0_i32_0 = arith.constant 0 : i32
    %c0_i32_1 = arith.constant 0 : i32
    return %c0_i32, %c0_i32_0 : i32, i32
  }
  func.func @transform_11(%arg0: i32) -> (i32, i32) {
    %c0_i32 = arith.constant 0 : i32
    %c0_i32_0 = arith.constant 0 : i32
    %c0_i32_1 = arith.constant 0 : i32
    return %c0_i32, %c0_i32_0 : i32, i32
  }
  func.func @transform_12(%arg0: i32) -> (i32, i32) {
    %c0_i32 = arith.constant 0 : i32
    %c0_i32_0 = arith.constant 0 : i32
    return %arg0, %c0_i32 : i32, i32
  }
  func.func @transform_13(%arg0: i32) -> (i32, i32) {
    %c0_i32 = arith.constant 0 : i32
    %c0_i32_0 = arith.constant 0 : i32
    return %arg0, %c0_i32 : i32, i32
  }
}

</mosaic_0001>

<llo_original>
// kernel: tpu_custom_call.1
$region0: #{tpu_custom_call.1}
  #allocation0 [shape = 'u32[]', space=smem, size = 0x4, offset = 0x4, fixed_abs, tag = 'smem constant byte address 0x4 - core index']
  #allocation1 [shape = 'u32[144,128]{1,0:T(1,128)}', space=vmem, size = 0x12000, scoped, tag = 'internal scratch']
  %s0 = inlined_call_operand.vmem [shape: f32[288,64], index: 0, kind: input, shape index: {}]
  %s1 = inlined_call_operand.vmem [shape: f32[288,64], index: 1, kind: input, shape index: {}]
  %s2 = inlined_call_operand.vmem [shape: f32[64,64], index: 2, kind: input, shape index: {}]
  %s3 = inlined_call_operand.vmem [shape: f32[64,64], index: 3, kind: input, shape index: {}]
  %s4 = inlined_call_operand.vmem [shape: f32[64,64], index: 4, kind: input, shape index: {}]
  %s5 = inlined_call_operand.vmem [shape: f32[1,64], index: 5, kind: input, shape index: {}]
  %s6 = inlined_call_operand.vmem [shape: f32[1,64], index: 6, kind: input, shape index: {}]
  %s7 = inlined_call_operand.vmem [shape: f32[64,64], index: 7, kind: input, shape index: {}]
  %s8 = inlined_call_operand.vmem [shape: f32[64,64], index: 8, kind: input, shape index: {}]
  %s9 = inlined_call_operand.vmem [shape: f32[64,64], index: 9, kind: input, shape index: {}]
  %s10 = inlined_call_operand.vmem [shape: f32[1,64], index: 10, kind: input, shape index: {}]
  %s11 = inlined_call_operand.vmem [shape: f32[1,64], index: 11, kind: input, shape index: {}]
  %s12 = inlined_call_operand.vmem [shape: f32[288,64], index: 12, kind: output, shape index: {0}]
  %s13 = inlined_call_operand.vmem [shape: f32[288,64], index: 13, kind: output, shape index: {1}]
  %14 = xla_tuple %s12, %s13
  %s15 = sld [smem:[#allocation0]]
  $region89: #{tpu_custom_call.1} parent=0
    _
  %s17 = ssub.s32 1, %s15
  %s18 = scalar_select 0, %s17, %s15
  loop: start=0, step=1, limit=4
  $region2: #{tpu_custom_call.1} parent=0 // loop_pre_header
    _
  $region3: #{tpu_custom_call.1} parent=0 // loop_header
    %s20 = sphi 0, %s24
    %p21 = scmp.ge.s32.totalorder %s20, 4
    %s30 = sphi 0, %s32
    %s33 = sphi 0, %s30
    %s34 = sphi 0, %s33
    %s50 = sphi 0, %s34
    %s56 = sphi 0, %s58
    %s59 = sphi 0, %s56
    %s60 = sphi 0, %s59
    %s76 = sphi 0, %s60
    %s80 = sphi 0, %s80
    %s82 = sphi 0, %s80
    %s83 = sphi 0, %s82
    %s97 = sphi 0, %s83
    %s101 = sphi 0, %s101
    %s103 = sphi 0, %s101
    %s104 = sphi 0, %s103
    %s118 = sphi 0, %s104
    %s122 = sphi 0, %s122
    %s124 = sphi 0, %s122
    %s125 = sphi 0, %s124
    %s139 = sphi 0, %s125
    %s143 = sphi 0, %s143
    %s145 = sphi 0, %s143
    %s146 = sphi 0, %s145
    %s160 = sphi 0, %s146
    %s164 = sphi 0, %s164
    %s166 = sphi 0, %s164
    %s167 = sphi 0, %s166
    %s181 = sphi 0, %s167
    %s185 = sphi 0, %s185
    %s187 = sphi 0, %s185
    %s188 = sphi 0, %s187
    %s202 = sphi 0, %s188
    %s206 = sphi 0, %s206
    %s208 = sphi 0, %s206
    %s209 = sphi 0, %s208
    %s223 = sphi 0, %s209
    %s227 = sphi 0, %s227
    %s229 = sphi 0, %s227
    %s230 = sphi 0, %s229
    %s244 = sphi 0, %s230
    %s248 = sphi 0, %s248
    %s250 = sphi 0, %s248
    %s251 = sphi 0, %s250
    %s265 = sphi 0, %s251
    %s269 = sphi 0, %s269
    %s271 = sphi 0, %s269
    %s272 = sphi 0, %s271
    %s286 = sphi 0, %s272
    %s292 = sphi 0, %s294
    %s295 = sphi 0, %s292
    %s296 = sphi 0, %s295
    %s312 = sphi 0, %s296
    %s318 = sphi 0, %s320
    %s321 = sphi 0, %s318
    %s322 = sphi 0, %s321
    %s338 = sphi 0, %s322
  $region4: #{tpu_custom_call.1} parent=0 // loop_header_branch
    %23 = sbr.rel (%p21) target = $region8
  $region5: #{tpu_custom_call.1} parent=0 // loop_body
    %s25 = ssub.s32 %s20, 1
    %s26 = ssub.s32 %s20, 2
    %s27 = sadd.s32 %s20, 1
    %s28 = ssub.s32 %s20, %s27
    %p29 = scmp.eq.s32.totalorder %s28, 0
    %s31 = sadd.s32 %s30, 1
    %s32 = scalar_select %p29, %s30, %s31
    %p35 = pneg %p29
    %p36 = scmp.eq.s32.totalorder %s20, 1
    %p37 = por %p35, %p36
    %p38 = scmp.ne.s32.totalorder %s30, %s33
    %p39 = scmp.eq.s32.totalorder %s20, 0
    %p40 = por %p38, %p39
    %p41 = scmp.ne.s32.totalorder %s30, %s33
    %p42 = scmp.eq.s32.totalorder %s25, 1
    %p43 = por %p41, %p42
    %p44 = scmp.ne.s32.totalorder %s33, %s34
    %p45 = scmp.eq.s32.totalorder %s25, 0
    %p46 = por %p44, %p45
    %p47 = scmp.ne.s32.totalorder %s33, %s34
    %p48 = scmp.eq.s32.totalorder %s26, 1
    %p49 = por %p47, %p48
    %p51 = scmp.ne.s32.totalorder %s34, %s50
    %p52 = scmp.eq.s32.totalorder %s26, 0
    %p53 = por %p51, %p52
    %s54 = ssub.s32 %s20, %s27
    %p55 = scmp.eq.s32.totalorder %s54, 0
    %s57 = sadd.s32 %s56, 1
    %s58 = scalar_select %p55, %s56, %s57
    %p61 = pneg %p55
    %p62 = scmp.eq.s32.totalorder %s20, 1
    %p63 = por %p61, %p62
    %p64 = scmp.ne.s32.totalorder %s56, %s59
    %p65 = scmp.eq.s32.totalorder %s20, 0
    %p66 = por %p64, %p65
    %p67 = scmp.ne.s32.totalorder %s56, %s59
    %p68 = scmp.eq.s32.totalorder %s25, 1
    %p69 = por %p67, %p68
    %p70 = scmp.ne.s32.totalorder %s59, %s60
    %p71 = scmp.eq.s32.totalorder %s25, 0
    %p72 = por %p70, %p71
    %p73 = scmp.ne.s32.totalorder %s59, %s60
    %p74 = scmp.eq.s32.totalorder %s26, 1
    %p75 = por %p73, %p74
    %p77 = scmp.ne.s32.totalorder %s60, %s76
    %p78 = scmp.eq.s32.totalorder %s26, 0
    %p79 = por %p77, %p78
    %s81 = sadd.s32 %s80, 1
    %p84 = scmp.eq.s32.totalorder %s20, 1
    %p85 = scmp.ne.s32.totalorder %s80, %s82
    %p86 = scmp.eq.s32.totalorder %s20, 0
    %p87 = por %p85, %p86
    %p88 = scmp.ne.s32.totalorder %s80, %s82
    %p89 = scmp.eq.s32.totalorder %s25, 1
    %p90 = por %p88, %p89
    %p91 = scmp.ne.s32.totalorder %s82, %s83
    %p92 = scmp.eq.s32.totalorder %s25, 0
    %p93 = por %p91, %p92
    %p94 = scmp.ne.s32.totalorder %s82, %s83
    %p95 = scmp.eq.s32.totalorder %s26, 1
    %p96 = por %p94, %p95
    %p98 = scmp.ne.s32.totalorder %s83, %s97
    %p99 = scmp.eq.s32.totalorder %s26, 0
    %p100 = por %p98, %p99
    %s102 = sadd.s32 %s101, 1
    %p105 = scmp.eq.s32.totalorder %s20, 1
    %p106 = scmp.ne.s32.totalorder %s101, %s103
    %p107 = scmp.eq.s32.totalorder %s20, 0
    %p108 = por %p106, %p107
    %p109 = scmp.ne.s32.totalorder %s101, %s103
    %p110 = scmp.eq.s32.totalorder %s25, 1
    %p111 = por %p109, %p110
    %p112 = scmp.ne.s32.totalorder %s103, %s104
    %p113 = scmp.eq.s32.totalorder %s25, 0
    %p114 = por %p112, %p113
    %p115 = scmp.ne.s32.totalorder %s103, %s104
    %p116 = scmp.eq.s32.totalorder %s26, 1
    %p117 = por %p115, %p116
    %p119 = scmp.ne.s32.totalorder %s104, %s118
    %p120 = scmp.eq.s32.totalorder %s26, 0
    %p121 = por %p119, %p120
    %s123 = sadd.s32 %s122, 1
    %p126 = scmp.eq.s32.totalorder %s20, 1
    %p127 = scmp.ne.s32.totalorder %s122, %s124
    %p128 = scmp.eq.s32.totalorder %s20, 0
    %p129 = por %p127, %p128
    %p130 = scmp.ne.s32.totalorder %s122, %s124
    %p131 = scmp.eq.s32.totalorder %s25, 1
    %p132 = por %p130, %p131
    %p133 = scmp.ne.s32.totalorder %s124, %s125
    %p134 = scmp.eq.s32.totalorder %s25, 0
    %p135 = por %p133, %p134
    %p136 = scmp.ne.s32.totalorder %s124, %s125
    %p137 = scmp.eq.s32.totalorder %s26, 1
    %p138 = por %p136, %p137
    %p140 = scmp.ne.s32.totalorder %s125, %s139
    %p141 = scmp.eq.s32.totalorder %s26, 0
    %p142 = por %p140, %p141
    %s144 = sadd.s32 %s143, 1
    %p147 = scmp.eq.s32.totalorder %s20, 1
    %p148 = scmp.ne.s32.totalorder %s143, %s145
    %p149 = scmp.eq.s32.totalorder %s20, 0
    %p150 = por %p148, %p149
    %p151 = scmp.ne.s32.totalorder %s143, %s145
    %p152 = scmp.eq.s32.totalorder %s25, 1
    %p153 = por %p151, %p152
    %p154 = scmp.ne.s32.totalorder %s145, %s146
    %p155 = scmp.eq.s32.totalorder %s25, 0
    %p156 = por %p154, %p155
    %p157 = scmp.ne.s32.totalorder %s145, %s146
    %p158 = scmp.eq.s32.totalorder %s26, 1
    %p159 = por %p157, %p158
    %p161 = scmp.ne.s32.totalorder %s146, %s160
    %p162 = scmp.eq.s32.totalorder %s26, 0
    %p163 = por %p161, %p162
    %s165 = sadd.s32 %s164, 1
    %p168 = scmp.eq.s32.totalorder %s20, 1
    %p169 = scmp.ne.s32.totalorder %s164, %s166
    %p170 = scmp.eq.s32.totalorder %s20, 0
    %p171 = por %p169, %p170
    %p172 = scmp.ne.s32.totalorder %s164, %s166
    %p173 = scmp.eq.s32.totalorder %s25, 1
    %p174 = por %p172, %p173
    %p175 = scmp.ne.s32.totalorder %s166, %s167
    %p176 = scmp.eq.s32.totalorder %s25, 0
    %p177 = por %p175, %p176
    %p178 = scmp.ne.s32.totalorder %s166, %s167
    %p179 = scmp.eq.s32.totalorder %s26, 1
    %p180 = por %p178, %p179
    %p182 = scmp.ne.s32.totalorder %s167, %s181
    %p183 = scmp.eq.s32.totalorder %s26, 0
    %p184 = por %p182, %p183
    %s186 = sadd.s32 %s185, 1
    %p189 = scmp.eq.s32.totalorder %s20, 1
    %p190 = scmp.ne.s32.totalorder %s185, %s187
    %p191 = scmp.eq.s32.totalorder %s20, 0
    %p192 = por %p190, %p191
    %p193 = scmp.ne.s32.totalorder %s185, %s187
    %p194 = scmp.eq.s32.totalorder %s25, 1
    %p195 = por %p193, %p194
    %p196 = scmp.ne.s32.totalorder %s187, %s188
    %p197 = scmp.eq.s32.totalorder %s25, 0
    %p198 = por %p196, %p197
    %p199 = scmp.ne.s32.totalorder %s187, %s188
    %p200 = scmp.eq.s32.totalorder %s26, 1
    %p201 = por %p199, %p200
    %p203 = scmp.ne.s32.totalorder %s188, %s202
    %p204 = scmp.eq.s32.totalorder %s26, 0
    %p205 = por %p203, %p204
    %s207 = sadd.s32 %s206, 1
    %p210 = scmp.eq.s32.totalorder %s20, 1
    %p211 = scmp.ne.s32.totalorder %s206, %s208
    %p212 = scmp.eq.s32.totalorder %s20, 0
    %p213 = por %p211, %p212
    %p214 = scmp.ne.s32.totalorder %s206, %s208
    %p215 = scmp.eq.s32.totalorder %s25, 1
    %p216 = por %p214, %p215
    %p217 = scmp.ne.s32.totalorder %s208, %s209
    %p218 = scmp.eq.s32.totalorder %s25, 0
    %p219 = por %p217, %p218
    %p220 = scmp.ne.s32.totalorder %s208, %s209
    %p221 = scmp.eq.s32.totalorder %s26, 1
    %p222 = por %p220, %p221
    %p224 = scmp.ne.s32.totalorder %s209, %s223
    %p225 = scmp.eq.s32.totalorder %s26, 0
    %p226 = por %p224, %p225
    %s228 = sadd.s32 %s227, 1
    %p231 = scmp.eq.s32.totalorder %s20, 1
    %p232 = scmp.ne.s32.totalorder %s227, %s229
    %p233 = scmp.eq.s32.totalorder %s20, 0
    %p234 = por %p232, %p233
    %p235 = scmp.ne.s32.totalorder %s227, %s229
    %p236 = scmp.eq.s32.totalorder %s25, 1
    %p237 = por %p235, %p236
    %p238 = scmp.ne.s32.totalorder %s229, %s230
    %p239 = scmp.eq.s32.totalorder %s25, 0
    %p240 = por %p238, %p239
    %p241 = scmp.ne.s32.totalorder %s229, %s230
    %p242 = scmp.eq.s32.totalorder %s26, 1
    %p243 = por %p241, %p242
    %p245 = scmp.ne.s32.totalorder %s230, %s244
    %p246 = scmp.eq.s32.totalorder %s26, 0
    %p247 = por %p245, %p246
    %s249 = sadd.s32 %s248, 1
    %p252 = scmp.eq.s32.totalorder %s20, 1
    %p253 = scmp.ne.s32.totalorder %s248, %s250
    %p254 = scmp.eq.s32.totalorder %s20, 0
    %p255 = por %p253, %p254
    %p256 = scmp.ne.s32.totalorder %s248, %s250
    %p257 = scmp.eq.s32.totalorder %s25, 1
    %p258 = por %p256, %p257
    %p259 = scmp.ne.s32.totalorder %s250, %s251
    %p260 = scmp.eq.s32.totalorder %s25, 0
    %p261 = por %p259, %p260
    %p262 = scmp.ne.s32.totalorder %s250, %s251
    %p263 = scmp.eq.s32.totalorder %s26, 1
    %p264 = por %p262, %p263
    %p266 = scmp.ne.s32.totalorder %s251, %s265
    %p267 = scmp.eq.s32.totalorder %s26, 0
    %p268 = por %p266, %p267
    %s270 = sadd.s32 %s269, 1
    %p273 = scmp.eq.s32.totalorder %s20, 1
    %p274 = scmp.ne.s32.totalorder %s269, %s271
    %p275 = scmp.eq.s32.totalorder %s20, 0
    %p276 = por %p274, %p275
    %p277 = scmp.ne.s32.totalorder %s269, %s271
    %p278 = scmp.eq.s32.totalorder %s25, 1
    %p279 = por %p277, %p278
    %p280 = scmp.ne.s32.totalorder %s271, %s272
    %p281 = scmp.eq.s32.totalorder %s25, 0
    %p282 = por %p280, %p281
    %p283 = scmp.ne.s32.totalorder %s271, %s272
    %p284 = scmp.eq.s32.totalorder %s26, 1
    %p285 = por %p283, %p284
    %p287 = scmp.ne.s32.totalorder %s272, %s286
    %p288 = scmp.eq.s32.totalorder %s26, 0
    %p289 = por %p287, %p288
    %s290 = ssub.s32 %s20, %s27
    %p291 = scmp.eq.s32.totalorder %s290, 0
    %s293 = sadd.s32 %s292, 1
    %s294 = scalar_select %p291, %s292, %s293
    %p297 = pneg %p291
    %p298 = scmp.eq.s32.totalorder %s20, 1
    %p299 = por %p297, %p298
    %p300 = scmp.ne.s32.totalorder %s292, %s295
    %p301 = scmp.eq.s32.totalorder %s20, 0
    %p302 = por %p300, %p301
    %p303 = scmp.ne.s32.totalorder %s292, %s295
    %p304 = scmp.eq.s32.totalorder %s25, 1
    %p305 = por %p303, %p304
    %p306 = scmp.ne.s32.totalorder %s295, %s296
    %p307 = scmp.eq.s32.totalorder %s25, 0
    %p308 = por %p306, %p307
    %p309 = scmp.ne.s32.totalorder %s295, %s296
    %p310 = scmp.eq.s32.totalorder %s26, 1
    %p311 = por %p309, %p310
    %p313 = scmp.ne.s32.totalorder %s296, %s312
    %p314 = scmp.eq.s32.totalorder %s26, 0
    %p315 = por %p313, %p314
    %s316 = ssub.s32 %s20, %s27
    %p317 = scmp.eq.s32.totalorder %s316, 0
    %s319 = sadd.s32 %s318, 1
    %s320 = scalar_select %p317, %s318, %s319
    %p323 = pneg %p317
    %p324 = scmp.eq.s32.totalorder %s20, 1
    %p325 = por %p323, %p324
    %p326 = scmp.ne.s32.totalorder %s318, %s321
    %p327 = scmp.eq.s32.totalorder %s20, 0
    %p328 = por %p326, %p327
    %p329 = scmp.ne.s32.totalorder %s318, %s321
    %p330 = scmp.eq.s32.totalorder %s25, 1
    %p331 = por %p329, %p330
    %p332 = scmp.ne.s32.totalorder %s321, %s322
    %p333 = scmp.eq.s32.totalorder %s25, 0
    %p334 = por %p332, %p333
    %p335 = scmp.ne.s32.totalorder %s321, %s322
    %p336 = scmp.eq.s32.totalorder %s26, 1
    %p337 = por %p335, %p336
    %p339 = scmp.ne.s32.totalorder %s322, %s338
    %p340 = scmp.eq.s32.totalorder %s26, 0
    %p341 = por %p339, %p340
    %p342 = scmp.le.s32.totalorder 1, %s20
    %p343 = scmp.lt.s32.totalorder %s20, 3
    %p344 = pnand %p342, %p343
    %p345 = pneg %p344
    // Predicated region
    $region9: #{tpu_custom_call.1} parent=5 // pred_check
      _
    $region10: #{tpu_custom_call.1} parent=5 // pred_check_branch
      %347 = sbr.rel (%p344) target = $region12
    $region11: #{tpu_custom_call.1} parent=5 // pred_region
      %s348 = ssub.s32 %s20, 1
      // Predicated region
      $region13: #{tpu_custom_call.1} parent=11 // pred_check
        %p349 = pneg %p93
      $region14: #{tpu_custom_call.1} parent=11 // pred_check_branch
        %351 = sbr.rel (%p349) target = $region16
      $region15: #{tpu_custom_call.1} parent=11 // pred_region
        _
      $region16: #{tpu_custom_call.1} parent=11 // pred_fallthru
        _
      // Predicated region
      $region17: #{tpu_custom_call.1} parent=11 // pred_check
        %p352 = pneg %p114
      $region18: #{tpu_custom_call.1} parent=11 // pred_check_branch
        %354 = sbr.rel (%p352) target = $region20
      $region19: #{tpu_custom_call.1} parent=11 // pred_region
        _
      $region20: #{tpu_custom_call.1} parent=11 // pred_fallthru
        _
      // Predicated region
      $region21: #{tpu_custom_call.1} parent=11 // pred_check
        %p355 = pneg %p135
      $region22: #{tpu_custom_call.1} parent=11 // pred_check_branch
        %357 = sbr.rel (%p355) target = $region24
      $region23: #{tpu_custom_call.1} parent=11 // pred_region
        _
      $region24: #{tpu_custom_call.1} parent=11 // pred_fallthru
        _
      // Predicated region
      $region25: #{tpu_custom_call.1} parent=11 // pred_check
        %p358 = pneg %p156
      $region26: #{tpu_custom_call.1} parent=11 // pred_check_branch
        %360 = sbr.rel (%p358) target = $region28
      $region27: #{tpu_custom_call.1} parent=11 // pred_region
        _
      $region28: #{tpu_custom_call.1} parent=11 // pred_fallthru
        _
      // Predicated region
      $region29: #{tpu_custom_call.1} parent=11 // pred_check
        %p361 = pneg %p177
      $region30: #{tpu_custom_call.1} parent=11 // pred_check_branch
        %363 = sbr.rel (%p361) target = $region32
      $region31: #{tpu_custom_call.1} parent=11 // pred_region
        _
      $region32: #{tpu_custom_call.1} parent=11 // pred_fallthru
        _
      // Predicated region
      $region33: #{tpu_custom_call.1} parent=11 // pred_check
        %p364 = pneg %p198
      $region34: #{tpu_custom_call.1} parent=11 // pred_check_branch
        %366 = sbr.rel (%p364) target = $region36
      $region35: #{tpu_custom_call.1} parent=11 // pred_region
        _
      $region36: #{tpu_custom_call.1} parent=11 // pred_fallthru
        _
      // Predicated region
      $region37: #{tpu_custom_call.1} parent=11 // pred_check
        %p367 = pneg %p219
      $region38: #{tpu_custom_call.1} parent=11 // pred_check_branch
        %369 = sbr.rel (%p367) target = $region40
      $region39: #{tpu_custom_call.1} parent=11 // pred_region
        _
      $region40: #{tpu_custom_call.1} parent=11 // pred_fallthru
        _
      // Predicated region
      $region41: #{tpu_custom_call.1} parent=11 // pred_check
        %p370 = pneg %p240
      $region42: #{tpu_custom_call.1} parent=11 // pred_check_branch
        %372 = sbr.rel (%p370) target = $region44
      $region43: #{tpu_custom_call.1} parent=11 // pred_region
        _
      $region44: #{tpu_custom_call.1} parent=11 // pred_fallthru
        _
      // Predicated region
      $region45: #{tpu_custom_call.1} parent=11 // pred_check
        %p373 = pneg %p261
      $region46: #{tpu_custom_call.1} parent=11 // pred_check_branch
        %375 = sbr.rel (%p373) target = $region48
      $region47: #{tpu_custom_call.1} parent=11 // pred_region
        _
      $region48: #{tpu_custom_call.1} parent=11 // pred_fallthru
        _
      // Predicated region
      $region49: #{tpu_custom_call.1} parent=11 // pred_check
        %p376 = pneg %p282
      $region50: #{tpu_custom_call.1} parent=11 // pred_check_branch
        %378 = sbr.rel (%p376) target = $region52
      $region51: #{tpu_custom_call.1} parent=11 // pred_region
        _
      $region52: #{tpu_custom_call.1} parent=11 // pred_fallthru
        _
    $region12: #{tpu_custom_call.1} parent=5 // pred_fallthru
      _
    %p379 = scmp.lt.s32.totalorder %s20, 2
    // Predicated region
    $region53: #{tpu_custom_call.1} parent=5 // pred_check
      %p380 = pneg %p379
    $region54: #{tpu_custom_call.1} parent=5 // pred_check_branch
      %382 = sbr.rel (%p380) target = $region56
    $region55: #{tpu_custom_call.1} parent=5 // pred_region
      // Predicated region
      $region57: #{tpu_custom_call.1} parent=55 // pred_check
        %p383 = pneg %p40
      $region58: #{tpu_custom_call.1} parent=55 // pred_check_branch
        %385 = sbr.rel (%p383) target = $region60
      $region59: #{tpu_custom_call.1} parent=55 // pred_region
        %s386 = smul.u32 18, %s20
        %p387 = scmp.lt.s32.totalorder %s386, 35
        %s388 = scalar_select %p387, %s386, 35
        %s389 = smul.addr %s388, 8
        %s390 = scalar_lea.vmem %s0, %s389
        %s391 = smul.u32 18, %s20
      $region60: #{tpu_custom_call.1} parent=55 // pred_fallthru
        _
      // Predicated region
      $region61: #{tpu_custom_call.1} parent=55 // pred_check
        %p392 = pneg %p66
      $region62: #{tpu_custom_call.1} parent=55 // pred_check_branch
        %394 = sbr.rel (%p392) target = $region64
      $region63: #{tpu_custom_call.1} parent=55 // pred_region
        %s395 = smul.u32 18, %s20
        %p396 = scmp.lt.s32.totalorder %s395, 35
        %s397 = scalar_select %p396, %s395, 35
        %s398 = smul.addr %s397, 8
        %s399 = scalar_lea.vmem %s1, %s398
        %s400 = smul.u32 18, %s20
      $region64: #{tpu_custom_call.1} parent=55 // pred_fallthru
        _
    $region56: #{tpu_custom_call.1} parent=5 // pred_fallthru
      _
    %p401 = scmp.le.s32.totalorder 1, %s20
    %p402 = scmp.lt.s32.totalorder %s20, 3
    %p403 = pnand %p401, %p402
    %p404 = pneg %p403
    // Predicated region
    $region65: #{tpu_custom_call.1} parent=5 // pred_check
      _
    $region66: #{tpu_custom_call.1} parent=5 // pred_check_branch
      %406 = sbr.rel (%p403) target = $region68
    $region67: #{tpu_custom_call.1} parent=5 // pred_region
      %s407 = ssub.s32 %s20, 1
      %s408 = smul.u32 18, %s25
      %p409 = scmp.lt.s32.totalorder %s408, 35
      %s410 = scalar_select %p409, %s408, 35
      %s411 = smul.addr %s410, 8
      %s412 = scalar_lea.vmem %s0, %s411
      %p413 = pneg %p46
      %p414 = pneg %p43
      %s415 = smul.u32 18, %s25
      %p416 = scmp.lt.s32.totalorder %s415, 35
      %s417 = scalar_select %p416, %s415, 35
      %s418 = smul.addr %s417, 8
      %s419 = scalar_lea.vmem %s1, %s418
      %p420 = pneg %p72
      %p421 = pneg %p69
      %p422 = pneg %p93
      %p423 = pneg %p90
      %p424 = pneg %p114
      %p425 = pneg %p111
      %p426 = pneg %p135
      %p427 = pneg %p132
      %p428 = pneg %p156
      %p429 = pneg %p153
      %p430 = pneg %p177
      %p431 = pneg %p174
      %p432 = pneg %p198
      %p433 = pneg %p195
      %p434 = pneg %p219
      %p435 = pneg %p216
      %p436 = pneg %p240
      %p437 = pneg %p237
      %p438 = pneg %p261
      %p439 = pneg %p258
      %p440 = pneg %p282
      %p441 = pneg %p279
      %p442 = pneg %p308
      %p443 = pneg %p305
      %s444 = smul.u32 18, %s25
      %p445 = scmp.lt.s32.totalorder %s444, 35
      %s446 = scalar_select %p445, %s444, 35
      %s447 = smul.addr %s446, 8
      %s448 = scalar_lea.vmem %s12, %s447
      %p449 = pneg %p334
      %p450 = pneg %p331
      %s451 = smul.u32 18, %s25
      %p452 = scmp.lt.s32.totalorder %s451, 35
      %s453 = scalar_select %p452, %s451, 35
      %s454 = smul.addr %s453, 8
      %s455 = scalar_lea.vmem %s13, %s454
      %s456 = smul.u32 18, %s25
      %p457 = scmp.lt.s32.totalorder %s456, 35
      %s458 = scalar_select %p457, %s456, 35
      %s459 = smul.addr %s458, 8
      %s460 = scalar_lea.vmem %s0, %s459
      %s461 = smul.u32 18, %s25
      %s462 = smul.u32 18, %s25
      %p463 = scmp.lt.s32.totalorder %s462, 35
      %s464 = scalar_select %p463, %s462, 35
      %s465 = smul.addr %s464, 8
      %s466 = scalar_lea.vmem %s1, %s465
      %s467 = smul.u32 18, %s25
      %s468 = smul.u32 18, %s25
      %p469 = scmp.lt.s32.totalorder %s468, 35
      %s470 = scalar_select %p469, %s468, 35
      %s471 = smul.addr %s470, 8
      %s472 = scalar_lea.vmem %s12, %s471
      %s473 = smul.u32 18, %s25
      %s474 = smul.u32 18, %s25
      %p475 = scmp.lt.s32.totalorder %s474, 35
      %s476 = scalar_select %p475, %s474, 35
      %s477 = smul.addr %s476, 8
      %s478 = scalar_lea.vmem %s13, %s477
      %s479 = smul.u32 18, %s25
      %v480 = vld [vmem:[%s460] sm:$0xff]
      %v481 = vld [vmem:[%s460 + $0x8] sm:$0xff]
      %v482 = vld [vmem:[%s460 + $0x10] sm:$0xff]
      %v483 = vld [vmem:[%s460 + $0x18] sm:$0xff]
      %v484 = vld [vmem:[%s460 + $0x20] sm:$0xff]
      %v485 = vld [vmem:[%s460 + $0x28] sm:$0xff]
      %v486 = vld [vmem:[%s460 + $0x30] sm:$0xff]
      %v487 = vld [vmem:[%s460 + $0x38] sm:$0xff]
      %v488 = vld [vmem:[%s460 + $0x40] sm:$0xff]
      %v489 = vld [vmem:[%s460 + $0x48] sm:$0xff]
      %v490 = vld [vmem:[%s460 + $0x50] sm:$0xff]
      %v491 = vld [vmem:[%s460 + $0x58] sm:$0xff]
      %v492 = vld [vmem:[%s460 + $0x60] sm:$0xff]
      %v493 = vld [vmem:[%s460 + $0x68] sm:$0xff]
      %v494 = vld [vmem:[%s460 + $0x70] sm:$0xff]
      %v495 = vld [vmem:[%s460 + $0x78] sm:$0xff]
      %v496 = vld [vmem:[%s460 + $0x80] sm:$0xff]
      %v497 = vld [vmem:[%s460 + $0x88] sm:$0xff]
      %v498 = vld [vmem:[%s466] sm:$0xff]
      %v499 = vld [vmem:[%s466 + $0x8] sm:$0xff]
      %v500 = vld [vmem:[%s466 + $0x10] sm:$0xff]
      %v501 = vld [vmem:[%s466 + $0x18] sm:$0xff]
      %v502 = vld [vmem:[%s466 + $0x20] sm:$0xff]
      %v503 = vld [vmem:[%s466 + $0x28] sm:$0xff]
      %v504 = vld [vmem:[%s466 + $0x30] sm:$0xff]
      %v505 = vld [vmem:[%s466 + $0x38] sm:$0xff]
      %v506 = vld [vmem:[%s466 + $0x40] sm:$0xff]
      %v507 = vld [vmem:[%s466 + $0x48] sm:$0xff]
      %v508 = vld [vmem:[%s466 + $0x50] sm:$0xff]
      %v509 = vld [vmem:[%s466 + $0x58] sm:$0xff]
      %v510 = vld [vmem:[%s466 + $0x60] sm:$0xff]
      %v511 = vld [vmem:[%s466 + $0x68] sm:$0xff]
      %v512 = vld [vmem:[%s466 + $0x70] sm:$0xff]
      %v513 = vld [vmem:[%s466 + $0x78] sm:$0xff]
      %v514 = vld [vmem:[%s466 + $0x80] sm:$0xff]
      %v515 = vld [vmem:[%s466 + $0x88] sm:$0xff]
      %v516 = vld [vmem:[%s2] sm:$0xff]
      %v517 = vld [vmem:[%s2 + $0x8] sm:$0xff]
      %v518 = vld [vmem:[%s2 + $0x10] sm:$0xff]
      %v519 = vld [vmem:[%s2 + $0x18] sm:$0xff]
      %v520 = vld [vmem:[%s2 + $0x20] sm:$0xff]
      %v521 = vld [vmem:[%s2 + $0x28] sm:$0xff]
      %v522 = vld [vmem:[%s2 + $0x30] sm:$0xff]
      %v523 = vld [vmem:[%s2 + $0x38] sm:$0xff]
      %vm524 = vcmask 523264
      %v526 = vsel %vm524, %v480, 0
      %v529 = vsel %vm524, %v481, 0
      %v532 = vsel %vm524, %v482, 0
      %v535 = vsel %vm524, %v483, 0
      %v538 = vsel %vm524, %v484, 0
      %v541 = vsel %vm524, %v485, 0
      %v544 = vsel %vm524, %v486, 0
      %v547 = vsel %vm524, %v487, 0
      %v550 = vsel %vm524, %v488, 0
      %v553 = vsel %vm524, %v489, 0
      %v556 = vsel %vm524, %v490, 0
      %v559 = vsel %vm524, %v491, 0
      %v562 = vsel %vm524, %v492, 0
      %v565 = vsel %vm524, %v493, 0
      %v568 = vsel %vm524, %v494, 0
      %v571 = vsel %vm524, %v495, 0
      %v574 = vsel %vm524, %v496, 0
      %v577 = vsel %vm524, %v497, 0
      %579 = vmatprep.subr.mxu0 0.0
      %580 = vmatpush1.msra.mxu0 %v516
      %581 = vmatprep.subr.mxu0 0.0
      %582 = vmatpush1.msra.mxu0 %v517
      %583 = vmatprep.subr.mxu0 0.0
      %584 = vmatpush1.msra.mxu0 %v518
      %585 = vmatprep.subr.mxu0 0.0
      %586 = vmatpush1.msra.mxu0 %v519
      %587 = vmatprep.subr.mxu0 0.0
      %588 = vmatpush1.msra.mxu0 %v520
      %589 = vmatprep.subr.mxu0 0.0
      %590 = vmatpush1.msra.mxu0 %v521
      %591 = vmatprep.subr.mxu0 0.0
      %592 = vmatpush1.msra.mxu0 %v522
      %593 = vmatprep.subr.mxu0 0.0
      %594 = vmatpush1.msra.mxu0 %v523
      %595 = vmatprep.subr.mxu0 0.0
      %596 = vmatpush1.msra.mxu0 0.0
      %597 = vmatprep.subr.mxu0 0.0
      %598 = vmatpush1.msra.mxu0 0.0
      %599 = vmatprep.subr.mxu0 0.0
      %600 = vmatpush1.msra.mxu0 0.0
      %601 = vmatprep.subr.mxu0 0.0
      %602 = vmatpush1.msra.mxu0 0.0
      %603 = vmatprep.subr.mxu0 0.0
      %604 = vmatpush1.msra.mxu0 0.0
      %605 = vmatprep.subr.mxu0 0.0
      %606 = vmatpush1.msra.mxu0 0.0
      %607 = vmatprep.subr.mxu0 0.0
      %608 = vmatpush1.msra.mxu0 0.0
      %609 = vmatprep.subr.mxu0 0.0
      %610 = vmatpush1.msra.mxu0 0.0
      %611 = vmatprep.subr.mxu0 0.0
      %612 = vmatpush1.msra.mxu0 0.0
      %613 = vmatprep.subr.mxu0 0.0
      %614 = vmatpush1.msra.mxu0 0.0
      %615 = vmatprep.subr.mxu0 0.0
      %616 = vmatpush1.msra.mxu0 0.0
      %617 = vmatprep.subr.mxu0 0.0
      %618 = vmatpush1.msra.mxu0 0.0
      %619 = vmatprep.subr.mxu0 0.0
      %620 = vmatpush1.msra.mxu0 0.0
      %621 = vmatprep.subr.mxu0 0.0
      %622 = vmatpush1.msra.mxu0 0.0
      %623 = vmatprep.subr.mxu0 0.0
      %624 = vmatpush1.msra.mxu0 0.0
      %625 = vmatprep.subr.mxu0 0.0
      %626 = vmatpush1.msra.mxu0 0.0
      %627 = vmatprep.subr.mxu0 0.0
      %628 = vmatpush1.msra.mxu0 0.0
      %629 = vmatprep.subr.mxu0 0.0
      %630 = vmatpush1.msra.mxu0 0.0
      %631 = vmatprep.subr.mxu0 0.0
      %632 = vmatpush1.msra.mxu0 0.0
      %633 = vmatprep.subr.mxu0 0.0
      %634 = vmatpush1.msra.mxu0 0.0
      %635 = vmatprep.subr.mxu0 0.0
      %636 = vmatpush1.msra.mxu0 0.0
      %637 = vmatprep.subr.mxu0 0.0
      %638 = vmatpush1.msra.mxu0 0.0
      %639 = vmatprep.subr.mxu0 0.0
      %640 = vmatpush1.msra.mxu0 0.0
      %641 = vmatprep.subr.mxu0 0.0
      %642 = vmatpush1.msra.mxu0 0.0
      %643 = vmatprep.mubr.f32.mxu0 0.0
      %644 = vmatmul.mubr.f32.gmra.mrb[0].mxu0 %v526
      %v645 = vpop.f32.mrb[0].mxu0
      %v646 = vadd.f32 0.0, %v645
      %v647 = vpop.f32.mrb[0].mxu0
      %648 = vmatprep.mubr.f32.mxu0 0.0
      %649 = vmatmul.mubr.f32.gmra.mrb[0].mxu0 %v529
      %v650 = vpop.f32.mrb[0].mxu0
      %v651 = vadd.f32 0.0, %v650
      %v652 = vpop.f32.mrb[0].mxu0
      %653 = vmatprep.mubr.f32.mxu0 0.0
      %654 = vmatmul.mubr.f32.gmra.mrb[0].mxu0 %v532
      %v655 = vpop.f32.mrb[0].mxu0
      %v656 = vadd.f32 0.0, %v655
      %v657 = vpop.f32.mrb[0].mxu0
      %658 = vmatprep.mubr.f32.mxu0 0.0
      %659 = vmatmul.mubr.f32.gmra.mrb[0].mxu0 %v535
      %v660 = vpop.f32.mrb[0].mxu0
      %v661 = vadd.f32 0.0, %v660
      %v662 = vpop.f32.mrb[0].mxu0
      %663 = vmatprep.mubr.f32.mxu0 0.0
      %664 = vmatmul.mubr.f32.gmra.mrb[0].mxu0 %v538
      %v665 = vpop.f32.mrb[0].mxu0
      %v666 = vadd.f32 0.0, %v665
      %v667 = vpop.f32.mrb[0].mxu0
      %668 = vmatprep.mubr.f32.mxu0 0.0
      %669 = vmatmul.mubr.f32.gmra.mrb[0].mxu0 %v541
      %v670 = vpop.f32.mrb[0].mxu0
      %v671 = vadd.f32 0.0, %v670
      %v672 = vpop.f32.mrb[0].mxu0
      %673 = vmatprep.mubr.f32.mxu0 0.0
      %674 = vmatmul.mubr.f32.gmra.mrb[0].mxu0 %v544
      %v675 = vpop.f32.mrb[0].mxu0
      %v676 = vadd.f32 0.0, %v675
      %v677 = vpop.f32.mrb[0].mxu0
      %678 = vmatprep.mubr.f32.mxu0 0.0
      %679 = vmatmul.mubr.f32.gmra.mrb[0].mxu0 %v547
      %v680 = vpop.f32.mrb[0].mxu0
      %v681 = vadd.f32 0.0, %v680
      %v682 = vpop.f32.mrb[0].mxu0
      %683 = vmatprep.mubr.f32.mxu0 0.0
      %684 = vmatmul.mubr.f32.gmra.mrb[0].mxu0 %v550
      %v685 = vpop.f32.mrb[0].mxu0
      %v686 = vadd.f32 0.0, %v685
      %v687 = vpop.f32.mrb[0].mxu0
      %688 = vmatprep.mubr.f32.mxu0 0.0
      %689 = vmatmul.mubr.f32.gmra.mrb[0].mxu0 %v553
      %v690 = vpop.f32.mrb[0].mxu0
      %v691 = vadd.f32 0.0, %v690
      %v692 = vpop.f32.mrb[0].mxu0
      %693 = vmatprep.mubr.f32.mxu0 0.0
      %694 = vmatmul.mubr.f32.gmra.mrb[0].mxu0 %v556
      %v695 = vpop.f32.mrb[0].mxu0
      %v696 = vadd.f32 0.0, %v695
      %v697 = vpop.f32.mrb[0].mxu0
      %698 = vmatprep.mubr.f32.mxu0 0.0
      %699 = vmatmul.mubr.f32.gmra.mrb[0].mxu0 %v559
      %v700 = vpop.f32.mrb[0].mxu0
      %v701 = vadd.f32 0.0, %v700
      %v702 = vpop.f32.mrb[0].mxu0
      %703 = vmatprep.mubr.f32.mxu0 0.0
      %704 = vmatmul.mubr.f32.gmra.mrb[0].mxu0 %v562
      %v705 = vpop.f32.mrb[0].mxu0
      %v706 = vadd.f32 0.0, %v705
      %v707 = vpop.f32.mrb[0].mxu0
      %708 = vmatprep.mubr.f32.mxu0 0.0
      %709 = vmatmul.mubr.f32.gmra.mrb[0].mxu0 %v565
      %v710 = vpop.f32.mrb[0].mxu0
      %v711 = vadd.f32 0.0, %v710
      %v712 = vpop.f32.mrb[0].mxu0
      %713 = vmatprep.mubr.f32.mxu0 0.0
      %714 = vmatmul.mubr.f32.gmra.mrb[0].mxu0 %v568
      %v715 = vpop.f32.mrb[0].mxu0
      %v716 = vadd.f32 0.0, %v715
      %v717 = vpop.f32.mrb[0].mxu0
      %718 = vmatprep.mubr.f32.mxu0 0.0
      %719 = vmatmul.mubr.f32.gmra.mrb[0].mxu0 %v571
      %v720 = vpop.f32.mrb[0].mxu0
      %v721 = vadd.f32 0.0, %v720
      %v722 = vpop.f32.mrb[0].mxu0
      %723 = vmatprep.mubr.f32.mxu0 0.0
      %724 = vmatmul.mubr.f32.gmra.mrb[0].mxu0 %v574
      %v725 = vpop.f32.mrb[0].mxu0
      %v726 = vadd.f32 0.0, %v725
      %v727 = vpop.f32.mrb[0].mxu0
      %728 = vmatprep.mubr.f32.mxu0 0.0
      %729 = vmatmul.mubr.f32.gmra.mrb[0].mxu0 %v577
      %v730 = vpop.f32.mrb[0].mxu0
      %v731 = vadd.f32 0.0, %v730
      %v732 = vpop.f32.mrb[0].mxu0
      %733 = vdwg.mxu0
      %v734 = vld [vmem:[%s3] sm:$0xff]
      %v735 = vld [vmem:[%s3 + $0x8] sm:$0xff]
      %v736 = vld [vmem:[%s3 + $0x10] sm:$0xff]
      %v737 = vld [vmem:[%s3 + $0x18] sm:$0xff]
      %v738 = vld [vmem:[%s3 + $0x20] sm:$0xff]
      %v739 = vld [vmem:[%s3 + $0x28] sm:$0xff]
      %v740 = vld [vmem:[%s3 + $0x30] sm:$0xff]
      %v741 = vld [vmem:[%s3 + $0x38] sm:$0xff]
      %v743 = vsel %vm524, %v498, 0
      %v746 = vsel %vm524, %v499, 0
      %v749 = vsel %vm524, %v500, 0
      %v752 = vsel %vm524, %v501, 0
      %v755 = vsel %vm524, %v502, 0
      %v758 = vsel %vm524, %v503, 0
      %v761 = vsel %vm524, %v504, 0
      %v764 = vsel %vm524, %v505, 0
      %v767 = vsel %vm524, %v506, 0
      %v770 = vsel %vm524, %v507, 0
      %v773 = vsel %vm524, %v508, 0
      %v776 = vsel %vm524, %v509, 0
      %v779 = vsel %vm524, %v510, 0
      %v782 = vsel %vm524, %v511, 0
      %v785 = vsel %vm524, %v512, 0
      %v788 = vsel %vm524, %v513, 0
      %v791 = vsel %vm524, %v514, 0
      %v794 = vsel %vm524, %v515, 0
      %796 = vmatprep.subr.mxu0 0.0
      %797 = vmatpush1.msra.mxu0 %v734
      %798 = vmatprep.subr.mxu0 0.0
      %799 = vmatpush1.msra.mxu0 %v735
      %800 = vmatprep.subr.mxu0 0.0
      %801 = vmatpush1.msra.mxu0 %v736
      %802 = vmatprep.subr.mxu0 0.0
      %803 = vmatpush1.msra.mxu0 %v737
      %804 = vmatprep.subr.mxu0 0.0
      %805 = vmatpush1.msra.mxu0 %v738
      %806 = vmatprep.subr.mxu0 0.0
      %807 = vmatpush1.msra.mxu0 %v739
      %808 = vmatprep.subr.mxu0 0.0
      %809 = vmatpush1.msra.mxu0 %v740
      %810 = vmatprep.subr.mxu0 0.0
      %811 = vmatpush1.msra.mxu0 %v741
      %812 = vmatprep.subr.mxu0 0.0
      %813 = vmatpush1.msra.mxu0 0.0
      %814 = vmatprep.subr.mxu0 0.0
      %815 = vmatpush1.msra.mxu0 0.0
      %816 = vmatprep.subr.mxu0 0.0
      %817 = vmatpush1.msra.mxu0 0.0
      %818 = vmatprep.subr.mxu0 0.0
      %819 = vmatpush1.msra.mxu0 0.0
      %820 = vmatprep.subr.mxu0 0.0
      %821 = vmatpush1.msra.mxu0 0.0
      %822 = vmatprep.subr.mxu0 0.0
      %823 = vmatpush1.msra.mxu0 0.0
      %824 = vmatprep.subr.mxu0 0.0
      %825 = vmatpush1.msra.mxu0 0.0
      %826 = vmatprep.subr.mxu0 0.0
      %827 = vmatpush1.msra.mxu0 0.0
      %828 = vmatprep.subr.mxu0 0.0
      %829 = vmatpush1.msra.mxu0 0.0
      %830 = vmatprep.subr.mxu0 0.0
      %831 = vmatpush1.msra.mxu0 0.0
      %832 = vmatprep.subr.mxu0 0.0
      %833 = vmatpush1.msra.mxu0 0.0
      %834 = vmatprep.subr.mxu0 0.0
      %835 = vmatpush1.msra.mxu0 0.0
      %836 = vmatprep.subr.mxu0 0.0
      %837 = vmatpush1.msra.mxu0 0.0
      %838 = vmatprep.subr.mxu0 0.0
      %839 = vmatpush1.msra.mxu0 0.0
      %840 = vmatprep.subr.mxu0 0.0
      %841 = vmatpush1.msra.mxu0 0.0
      %842 = vmatprep.subr.mxu0 0.0
      %843 = vmatpush1.msra.mxu0 0.0
      %844 = vmatprep.subr.mxu0 0.0
      %845 = vmatpush1.msra.mxu0 0.0
      %846 = vmatprep.subr.mxu0 0.0
      %847 = vmatpush1.msra.mxu0 0.0
      %848 = vmatprep.subr.mxu0 0.0
      %849 = vmatpush1.msra.mxu0 0.0
      %850 = vmatprep.subr.mxu0 0.0
      %851 = vmatpush1.msra.mxu0 0.0
      %852 = vmatprep.subr.mxu0 0.0
      %853 = vmatpush1.msra.mxu0 0.0
      %854 = vmatprep.subr.mxu0 0.0
      %855 = vmatpush1.msra.mxu0 0.0
      %856 = vmatprep.subr.mxu0 0.0
      %857 = vmatpush1.msra.mxu0 0.0
      %858 = vmatprep.subr.mxu0 0.0
      %859 = vmatpush1.msra.mxu0 0.0
      %860 = vmatprep.mubr.f32.mxu0 0.0
      %861 = vmatmul.mubr.f32.gmra.mrb[0].mxu0 %v743
      %v862 = vpop.f32.mrb[0].mxu0
      %v863 = vadd.f32 0.0, %v862
      %v864 = vpop.f32.mrb[0].mxu0
      %865 = vmatprep.mubr.f32.mxu0 0.0
      %866 = vmatmul.mubr.f32.gmra.mrb[0].mxu0 %v746
      %v867 = vpop.f32.mrb[0].mxu0
      %v868 = vadd.f32 0.0, %v867
      %v869 = vpop.f32.mrb[0].mxu0
      %870 = vmatprep.mubr.f32.mxu0 0.0
      %871 = vmatmul.mubr.f32.gmra.mrb[0].mxu0 %v749
      %v872 = vpop.f32.mrb[0].mxu0
      %v873 = vadd.f32 0.0, %v872
      %v874 = vpop.f32.mrb[0].mxu0
      %875 = vmatprep.mubr.f32.mxu0 0.0
      %876 = vmatmul.mubr.f32.gmra.mrb[0].mxu0 %v752
      %v877 = vpop.f32.mrb[0].mxu0
      %v878 = vadd.f32 0.0, %v877
      %v879 = vpop.f32.mrb[0].mxu0
      %880 = vmatprep.mubr.f32.mxu0 0.0
      %881 = vmatmul.mubr.f32.gmra.mrb[0].mxu0 %v755
      %v882 = vpop.f32.mrb[0].mxu0
      %v883 = vadd.f32 0.0, %v882
      %v884 = vpop.f32.mrb[0].mxu0
      %885 = vmatprep.mubr.f32.mxu0 0.0
      %886 = vmatmul.mubr.f32.gmra.mrb[0].mxu0 %v758
      %v887 = vpop.f32.mrb[0].mxu0
      %v888 = vadd.f32 0.0, %v887
      %v889 = vpop.f32.mrb[0].mxu0
      %890 = vmatprep.mubr.f32.mxu0 0.0
      %891 = vmatmul.mubr.f32.gmra.mrb[0].mxu0 %v761
      %v892 = vpop.f32.mrb[0].mxu0
      %v893 = vadd.f32 0.0, %v892
      %v894 = vpop.f32.mrb[0].mxu0
      %895 = vmatprep.mubr.f32.mxu0 0.0
      %896 = vmatmul.mubr.f32.gmra.mrb[0].mxu0 %v764
      %v897 = vpop.f32.mrb[0].mxu0
      %v898 = vadd.f32 0.0, %v897
      %v899 = vpop.f32.mrb[0].mxu0
      %900 = vmatprep.mubr.f32.mxu0 0.0
      %901 = vmatmul.mubr.f32.gmra.mrb[0].mxu0 %v767
      %v902 = vpop.f32.mrb[0].mxu0
      %v903 = vadd.f32 0.0, %v902
      %v904 = vpop.f32.mrb[0].mxu0
      %905 = vmatprep.mubr.f32.mxu0 0.0
      %906 = vmatmul.mubr.f32.gmra.mrb[0].mxu0 %v770
      %v907 = vpop.f32.mrb[0].mxu0
      %v908 = vadd.f32 0.0, %v907
      %v909 = vpop.f32.mrb[0].mxu0
      %910 = vmatprep.mubr.f32.mxu0 0.0
      %911 = vmatmul.mubr.f32.gmra.mrb[0].mxu0 %v773
      %v912 = vpop.f32.mrb[0].mxu0
      %v913 = vadd.f32 0.0, %v912
      %v914 = vpop.f32.mrb[0].mxu0
      %915 = vmatprep.mubr.f32.mxu0 0.0
      %916 = vmatmul.mubr.f32.gmra.mrb[0].mxu0 %v776
      %v917 = vpop.f32.mrb[0].mxu0
      %v918 = vadd.f32 0.0, %v917
      %v919 = vpop.f32.mrb[0].mxu0
      %920 = vmatprep.mubr.f32.mxu0 0.0
      %921 = vmatmul.mubr.f32.gmra.mrb[0].mxu0 %v779
      %v922 = vpop.f32.mrb[0].mxu0
      %v923 = vadd.f32 0.0, %v922
      %v924 = vpop.f32.mrb[0].mxu0
      %925 = vmatprep.mubr.f32.mxu0 0.0
      %926 = vmatmul.mubr.f32.gmra.mrb[0].mxu0 %v782
      %v927 = vpop.f32.mrb[0].mxu0
      %v928 = vadd.f32 0.0, %v927
      %v929 = vpop.f32.mrb[0].mxu0
      %930 = vmatprep.mubr.f32.mxu0 0.0
      %931 = vmatmul.mubr.f32.gmra.mrb[0].mxu0 %v785
      %v932 = vpop.f32.mrb[0].mxu0
      %v933 = vadd.f32 0.0, %v932
      %v934 = vpop.f32.mrb[0].mxu0
      %935 = vmatprep.mubr.f32.mxu0 0.0
      %936 = vmatmul.mubr.f32.gmra.mrb[0].mxu0 %v788
      %v937 = vpop.f32.mrb[0].mxu0
      %v938 = vadd.f32 0.0, %v937
      %v939 = vpop.f32.mrb[0].mxu0
      %940 = vmatprep.mubr.f32.mxu0 0.0
      %941 = vmatmul.mubr.f32.gmra.mrb[0].mxu0 %v791
      %v942 = vpop.f32.mrb[0].mxu0
      %v943 = vadd.f32 0.0, %v942
      %v944 = vpop.f32.mrb[0].mxu0
      %945 = vmatprep.mubr.f32.mxu0 0.0
      %946 = vmatmul.mubr.f32.gmra.mrb[0].mxu0 %v794
      %v947 = vpop.f32.mrb[0].mxu0
      %v948 = vadd.f32 0.0, %v947
      %v949 = vpop.f32.mrb[0].mxu0
      %950 = vdwg.mxu0
      %v951 = vadd.f32 %v480, %v498
      %v952 = vadd.f32 %v481, %v499
      %v953 = vadd.f32 %v482, %v500
      %v954 = vadd.f32 %v483, %v501
      %v955 = vadd.f32 %v484, %v502
      %v956 = vadd.f32 %v485, %v503
      %v957 = vadd.f32 %v486, %v504
      %v958 = vadd.f32 %v487, %v505
      %v959 = vadd.f32 %v488, %v506
      %v960 = vadd.f32 %v489, %v507
      %v961 = vadd.f32 %v490, %v508
      %v962 = vadd.f32 %v491, %v509
      %v963 = vadd.f32 %v492, %v510
      %v964 = vadd.f32 %v493, %v511
      %v965 = vadd.f32 %v494, %v512
      %v966 = vadd.f32 %v495, %v513
      %v967 = vadd.f32 %v496, %v514
      %v968 = vadd.f32 %v497, %v515
      %v969 = vld [vmem:[%s4] sm:$0xff]
      %v970 = vld [vmem:[%s4 + $0x8] sm:$0xff]
      %v971 = vld [vmem:[%s4 + $0x10] sm:$0xff]
      %v972 = vld [vmem:[%s4 + $0x18] sm:$0xff]
      %v973 = vld [vmem:[%s4 + $0x20] sm:$0xff]
      %v974 = vld [vmem:[%s4 + $0x28] sm:$0xff]
      %v975 = vld [vmem:[%s4 + $0x30] sm:$0xff]
      %v976 = vld [vmem:[%s4 + $0x38] sm:$0xff]
      %v978 = vsel %vm524, %v951, 0
      %v981 = vsel %vm524, %v952, 0
      %v984 = vsel %vm524, %v953, 0
      %v987 = vsel %vm524, %v954, 0
      %v990 = vsel %vm524, %v955, 0
      %v993 = vsel %vm524, %v956, 0
      %v996 = vsel %vm524, %v957, 0
      %v999 = vsel %vm524, %v958, 0
      %v1002 = vsel %vm524, %v959, 0
      %v1005 = vsel %vm524, %v960, 0
      %v1008 = vsel %vm524, %v961, 0
      %v1011 = vsel %vm524, %v962, 0
      %v1014 = vsel %vm524, %v963, 0
      %v1017 = vsel %vm524, %v964, 0
      %v1020 = vsel %vm524, %v965, 0
      %v1023 = vsel %vm524, %v966, 0
      %v1026 = vsel %vm524, %v967, 0
      %v1029 = vsel %vm524, %v968, 0
      %1031 = vmatprep.subr.mxu0 0.0
      %1032 = vmatpush1.msra.mxu0 %v969
      %1033 = vmatprep.subr.mxu0 0.0
      %1034 = vmatpush1.msra.mxu0 %v970
      %1035 = vmatprep.subr.mxu0 0.0
      %1036 = vmatpush1.msra.mxu0 %v971
      %1037 = vmatprep.subr.mxu0 0.0
      %1038 = vmatpush1.msra.mxu0 %v972
      %1039 = vmatprep.subr.mxu0 0.0
      %1040 = vmatpush1.msra.mxu0 %v973
      %1041 = vmatprep.subr.mxu0 0.0
      %1042 = vmatpush1.msra.mxu0 %v974
      %1043 = vmatprep.subr.mxu0 0.0
      %1044 = vmatpush1.msra.mxu0 %v975
      %1045 = vmatprep.subr.mxu0 0.0
      %1046 = vmatpush1.msra.mxu0 %v976
      %1047 = vmatprep.subr.mxu0 0.0
      %1048 = vmatpush1.msra.mxu0 0.0
      %1049 = vmatprep.subr.mxu0 0.0
      %1050 = vmatpush1.msra.mxu0 0.0
      %1051 = vmatprep.subr.mxu0 0.0
      %1052 = vmatpush1.msra.mxu0 0.0
      %1053 = vmatprep.subr.mxu0 0.0
      %1054 = vmatpush1.msra.mxu0 0.0
      %1055 = vmatprep.subr.mxu0 0.0
      %1056 = vmatpush1.msra.mxu0 0.0
      %1057 = vmatprep.subr.mxu0 0.0
      %1058 = vmatpush1.msra.mxu0 0.0
      %1059 = vmatprep.subr.mxu0 0.0
      %1060 = vmatpush1.msra.mxu0 0.0
      %1061 = vmatprep.subr.mxu0 0.0
      %1062 = vmatpush1.msra.mxu0 0.0
      %1063 = vmatprep.subr.mxu0 0.0
      %1064 = vmatpush1.msra.mxu0 0.0
      %1065 = vmatprep.subr.mxu0 0.0
      %1066 = vmatpush1.msra.mxu0 0.0
      %1067 = vmatprep.subr.mxu0 0.0
      %1068 = vmatpush1.msra.mxu0 0.0
      %1069 = vmatprep.subr.mxu0 0.0
      %1070 = vmatpush1.msra.mxu0 0.0
      %1071 = vmatprep.subr.mxu0 0.0
      %1072 = vmatpush1.msra.mxu0 0.0
      %1073 = vmatprep.subr.mxu0 0.0
      %1074 = vmatpush1.msra.mxu0 0.0
      %1075 = vmatprep.subr.mxu0 0.0
      %1076 = vmatpush1.msra.mxu0 0.0
      %1077 = vmatprep.subr.mxu0 0.0
      %1078 = vmatpush1.msra.mxu0 0.0
      %1079 = vmatprep.subr.mxu0 0.0
      %1080 = vmatpush1.msra.mxu0 0.0
      %1081 = vmatprep.subr.mxu0 0.0
      %1082 = vmatpush1.msra.mxu0 0.0
      %1083 = vmatprep.subr.mxu0 0.0
      %1084 = vmatpush1.msra.mxu0 0.0
      %1085 = vmatprep.subr.mxu0 0.0
      %1086 = vmatpush1.msra.mxu0 0.0
      %1087 = vmatprep.subr.mxu0 0.0
      %1088 = vmatpush1.msra.mxu0 0.0
      %1089 = vmatprep.subr.mxu0 0.0
      %1090 = vmatpush1.msra.mxu0 0.0
      %1091 = vmatprep.subr.mxu0 0.0
      %1092 = vmatpush1.msra.mxu0 0.0
      %1093 = vmatprep.subr.mxu0 0.0
      %1094 = vmatpush1.msra.mxu0 0.0
      %1095 = vmatprep.mubr.f32.mxu0 0.0
      %1096 = vmatmul.mubr.f32.gmra.mrb[0].mxu0 %v978
      %v1097 = vpop.f32.mrb[0].mxu0
      %v1098 = vadd.f32 0.0, %v1097
      %v1099 = vpop.f32.mrb[0].mxu0
      %1100 = vmatprep.mubr.f32.mxu0 0.0
      %1101 = vmatmul.mubr.f32.gmra.mrb[0].mxu0 %v981
      %v1102 = vpop.f32.mrb[0].mxu0
      %v1103 = vadd.f32 0.0, %v1102
      %v1104 = vpop.f32.mrb[0].mxu0
      %1105 = vmatprep.mubr.f32.mxu0 0.0
      %1106 = vmatmul.mubr.f32.gmra.mrb[0].mxu0 %v984
      %v1107 = vpop.f32.mrb[0].mxu0
      %v1108 = vadd.f32 0.0, %v1107
      %v1109 = vpop.f32.mrb[0].mxu0
      %1110 = vmatprep.mubr.f32.mxu0 0.0
      %1111 = vmatmul.mubr.f32.gmra.mrb[0].mxu0 %v987
      %v1112 = vpop.f32.mrb[0].mxu0
      %v1113 = vadd.f32 0.0, %v1112
      %v1114 = vpop.f32.mrb[0].mxu0
      %1115 = vmatprep.mubr.f32.mxu0 0.0
      %1116 = vmatmul.mubr.f32.gmra.mrb[0].mxu0 %v990
      %v1117 = vpop.f32.mrb[0].mxu0
      %v1118 = vadd.f32 0.0, %v1117
      %v1119 = vpop.f32.mrb[0].mxu0
      %1120 = vmatprep.mubr.f32.mxu0 0.0
      %1121 = vmatmul.mubr.f32.gmra.mrb[0].mxu0 %v993
      %v1122 = vpop.f32.mrb[0].mxu0
      %v1123 = vadd.f32 0.0, %v1122
      %v1124 = vpop.f32.mrb[0].mxu0
      %1125 = vmatprep.mubr.f32.mxu0 0.0
      %1126 = vmatmul.mubr.f32.gmra.mrb[0].mxu0 %v996
      %v1127 = vpop.f32.mrb[0].mxu0
      %v1128 = vadd.f32 0.0, %v1127
      %v1129 = vpop.f32.mrb[0].mxu0
      %1130 = vmatprep.mubr.f32.mxu0 0.0
      %1131 = vmatmul.mubr.f32.gmra.mrb[0].mxu0 %v999
      %v1132 = vpop.f32.mrb[0].mxu0
      %v1133 = vadd.f32 0.0, %v1132
      %v1134 = vpop.f32.mrb[0].mxu0
      %1135 = vmatprep.mubr.f32.mxu0 0.0
      %1136 = vmatmul.mubr.f32.gmra.mrb[0].mxu0 %v1002
      %v1137 = vpop.f32.mrb[0].mxu0
      %v1138 = vadd.f32 0.0, %v1137
      %v1139 = vpop.f32.mrb[0].mxu0
      %1140 = vmatprep.mubr.f32.mxu0 0.0
      %1141 = vmatmul.mubr.f32.gmra.mrb[0].mxu0 %v1005
      %v1142 = vpop.f32.mrb[0].mxu0
      %v1143 = vadd.f32 0.0, %v1142
      %v1144 = vpop.f32.mrb[0].mxu0
      %1145 = vmatprep.mubr.f32.mxu0 0.0
      %1146 = vmatmul.mubr.f32.gmra.mrb[0].mxu0 %v1008
      %v1147 = vpop.f32.mrb[0].mxu0
      %v1148 = vadd.f32 0.0, %v1147
      %v1149 = vpop.f32.mrb[0].mxu0
      %1150 = vmatprep.mubr.f32.mxu0 0.0
      %1151 = vmatmul.mubr.f32.gmra.mrb[0].mxu0 %v1011
      %v1152 = vpop.f32.mrb[0].mxu0
      %v1153 = vadd.f32 0.0, %v1152
      %v1154 = vpop.f32.mrb[0].mxu0
      %1155 = vmatprep.mubr.f32.mxu0 0.0
      %1156 = vmatmul.mubr.f32.gmra.mrb[0].mxu0 %v1014
      %v1157 = vpop.f32.mrb[0].mxu0
      %v1158 = vadd.f32 0.0, %v1157
      %v1159 = vpop.f32.mrb[0].mxu0
      %1160 = vmatprep.mubr.f32.mxu0 0.0
      %1161 = vmatmul.mubr.f32.gmra.mrb[0].mxu0 %v1017
      %v1162 = vpop.f32.mrb[0].mxu0
      %v1163 = vadd.f32 0.0, %v1162
      %v1164 = vpop.f32.mrb[0].mxu0
      %1165 = vmatprep.mubr.f32.mxu0 0.0
      %1166 = vmatmul.mubr.f32.gmra.mrb[0].mxu0 %v1020
      %v1167 = vpop.f32.mrb[0].mxu0
      %v1168 = vadd.f32 0.0, %v1167
      %v1169 = vpop.f32.mrb[0].mxu0
      %1170 = vmatprep.mubr.f32.mxu0 0.0
      %1171 = vmatmul.mubr.f32.gmra.mrb[0].mxu0 %v1023
      %v1172 = vpop.f32.mrb[0].mxu0
      %v1173 = vadd.f32 0.0, %v1172
      %v1174 = vpop.f32.mrb[0].mxu0
      %1175 = vmatprep.mubr.f32.mxu0 0.0
      %1176 = vmatmul.mubr.f32.gmra.mrb[0].mxu0 %v1026
      %v1177 = vpop.f32.mrb[0].mxu0
      %v1178 = vadd.f32 0.0, %v1177
      %v1179 = vpop.f32.mrb[0].mxu0
      %1180 = vmatprep.mubr.f32.mxu0 0.0
      %1181 = vmatmul.mubr.f32.gmra.mrb[0].mxu0 %v1029
      %v1182 = vpop.f32.mrb[0].mxu0
      %v1183 = vadd.f32 0.0, %v1182
      %v1184 = vpop.f32.mrb[0].mxu0
      %1185 = vdwg.mxu0
      %v1186 = vsub.f32 %v646, %v863
      %v1187 = vsub.f32 %v651, %v868
      %v1188 = vsub.f32 %v656, %v873
      %v1189 = vsub.f32 %v661, %v878
      %v1190 = vsub.f32 %v666, %v883
      %v1191 = vsub.f32 %v671, %v888
      %v1192 = vsub.f32 %v676, %v893
      %v1193 = vsub.f32 %v681, %v898
      %v1194 = vsub.f32 %v686, %v903
      %v1195 = vsub.f32 %v691, %v908
      %v1196 = vsub.f32 %v696, %v913
      %v1197 = vsub.f32 %v701, %v918
      %v1198 = vsub.f32 %v706, %v923
      %v1199 = vsub.f32 %v711, %v928
      %v1200 = vsub.f32 %v716, %v933
      %v1201 = vsub.f32 %v721, %v938
      %v1202 = vsub.f32 %v726, %v943
      %v1203 = vsub.f32 %v731, %v948
      %v1204 = vld [vmem:[%s5] sm:$0x1]
      %v1206 = vlaneseq
      %v1207 = vshrl.u32 %v1206, 7
      %v1208 = vsub.s32 0, %v1207
      %v1209 = vrot.slane %v1204, %v1208
      %v1211 = vadd.f32 %v1186, %v1209
      %v1212 = vadd.f32 %v1187, %v1209
      %v1213 = vadd.f32 %v1188, %v1209
      %v1214 = vadd.f32 %v1189, %v1209
      %v1215 = vadd.f32 %v1190, %v1209
      %v1216 = vadd.f32 %v1191, %v1209
      %v1217 = vadd.f32 %v1192, %v1209
      %v1218 = vadd.f32 %v1193, %v1209
      %v1219 = vadd.f32 %v1194, %v1209
      %v1220 = vadd.f32 %v1195, %v1209
      %v1221 = vadd.f32 %v1196, %v1209
      %v1222 = vadd.f32 %v1197, %v1209
      %v1223 = vadd.f32 %v1198, %v1209
      %v1224 = vadd.f32 %v1199, %v1209
      %v1225 = vadd.f32 %v1200, %v1209
      %v1226 = vadd.f32 %v1201, %v1209
      %v1227 = vadd.f32 %v1202, %v1209
      %v1228 = vadd.f32 %v1203, %v1209
      %v1229 = vsub.f32 %v1098, %v646
      %v1230 = vsub.f32 %v1103, %v651
      %v1231 = vsub.f32 %v1108, %v656
      %v1232 = vsub.f32 %v1113, %v661
      %v1233 = vsub.f32 %v1118, %v666
      %v1234 = vsub.f32 %v1123, %v671
      %v1235 = vsub.f32 %v1128, %v676
      %v1236 = vsub.f32 %v1133, %v681
      %v1237 = vsub.f32 %v1138, %v686
      %v1238 = vsub.f32 %v1143, %v691
      %v1239 = vsub.f32 %v1148, %v696
      %v1240 = vsub.f32 %v1153, %v701
      %v1241 = vsub.f32 %v1158, %v706
      %v1242 = vsub.f32 %v1163, %v711
      %v1243 = vsub.f32 %v1168, %v716
      %v1244 = vsub.f32 %v1173, %v721
      %v1245 = vsub.f32 %v1178, %v726
      %v1246 = vsub.f32 %v1183, %v731
      %v1247 = vsub.f32 %v1229, %v863
      %v1248 = vsub.f32 %v1230, %v868
      %v1249 = vsub.f32 %v1231, %v873
      %v1250 = vsub.f32 %v1232, %v878
      %v1251 = vsub.f32 %v1233, %v883
      %v1252 = vsub.f32 %v1234, %v888
      %v1253 = vsub.f32 %v1235, %v893
      %v1254 = vsub.f32 %v1236, %v898
      %v1255 = vsub.f32 %v1237, %v903
      %v1256 = vsub.f32 %v1238, %v908
      %v1257 = vsub.f32 %v1239, %v913
      %v1258 = vsub.f32 %v1240, %v918
      %v1259 = vsub.f32 %v1241, %v923
      %v1260 = vsub.f32 %v1242, %v928
      %v1261 = vsub.f32 %v1243, %v933
      %v1262 = vsub.f32 %v1244, %v938
      %v1263 = vsub.f32 %v1245, %v943
      %v1264 = vsub.f32 %v1246, %v948
      %v1265 = vld [vmem:[%s6] sm:$0x1]
      %v1267 = vlaneseq
      %v1268 = vshrl.u32 %v1267, 7
      %v1269 = vsub.s32 0, %v1268
      %v1270 = vrot.slane %v1265, %v1269
      %v1272 = vadd.f32 %v1247, %v1270
      %v1273 = vadd.f32 %v1248, %v1270
      %v1274 = vadd.f32 %v1249, %v1270
      %v1275 = vadd.f32 %v1250, %v1270
      %v1276 = vadd.f32 %v1251, %v1270
      %v1277 = vadd.f32 %v1252, %v1270
      %v1278 = vadd.f32 %v1253, %v1270
      %v1279 = vadd.f32 %v1254, %v1270
      %v1280 = vadd.f32 %v1255, %v1270
      %v1281 = vadd.f32 %v1256, %v1270
      %v1282 = vadd.f32 %v1257, %v1270
      %v1283 = vadd.f32 %v1258, %v1270
      %v1284 = vadd.f32 %v1259, %v1270
      %v1285 = vadd.f32 %v1260, %v1270
      %v1286 = vadd.f32 %v1261, %v1270
      %v1287 = vadd.f32 %v1262, %v1270
      %v1288 = vadd.f32 %v1263, %v1270
      %v1289 = vadd.f32 %v1264, %v1270
      %v1290 = vld [vmem:[%s7] sm:$0xff]
      %v1291 = vld [vmem:[%s7 + $0x8] sm:$0xff]
      %v1292 = vld [vmem:[%s7 + $0x10] sm:$0xff]
      %v1293 = vld [vmem:[%s7 + $0x18] sm:$0xff]
      %v1294 = vld [vmem:[%s7 + $0x20] sm:$0xff]
      %v1295 = vld [vmem:[%s7 + $0x28] sm:$0xff]
      %v1296 = vld [vmem:[%s7 + $0x30] sm:$0xff]
      %v1297 = vld [vmem:[%s7 + $0x38] sm:$0xff]
      %v1299 = vsel %vm524, %v1211, 0
      %v1302 = vsel %vm524, %v1212, 0
      %v1305 = vsel %vm524, %v1213, 0
      %v1308 = vsel %vm524, %v1214, 0
      %v1311 = vsel %vm524, %v1215, 0
      %v1314 = vsel %vm524, %v1216, 0
      %v1317 = vsel %vm524, %v1217, 0
      %v1320 = vsel %vm524, %v1218, 0
      %v1323 = vsel %vm524, %v1219, 0
      %v1326 = vsel %vm524, %v1220, 0
      %v1329 = vsel %vm524, %v1221, 0
      %v1332 = vsel %vm524, %v1222, 0
      %v1335 = vsel %vm524, %v1223, 0
      %v1338 = vsel %vm524, %v1224, 0
      %v1341 = vsel %vm524, %v1225, 0
      %v1344 = vsel %vm524, %v1226, 0
      %v1347 = vsel %vm524, %v1227, 0
      %v1350 = vsel %vm524, %v1228, 0
      %1352 = vmatprep.subr.mxu0 0.0
      %1353 = vmatpush1.msra.mxu0 %v1290
      %1354 = vmatprep.subr.mxu0 0.0
      %1355 = vmatpush1.msra.mxu0 %v1291
      %1356 = vmatprep.subr.mxu0 0.0
      %1357 = vmatpush1.msra.mxu0 %v1292
      %1358 = vmatprep.subr.mxu0 0.0
      %1359 = vmatpush1.msra.mxu0 %v1293
      %1360 = vmatprep.subr.mxu0 0.0
      %1361 = vmatpush1.msra.mxu0 %v1294
      %1362 = vmatprep.subr.mxu0 0.0
      %1363 = vmatpush1.msra.mxu0 %v1295
      %1364 = vmatprep.subr.mxu0 0.0
      %1365 = vmatpush1.msra.mxu0 %v1296
      %1366 = vmatprep.subr.mxu0 0.0
      %1367 = vmatpush1.msra.mxu0 %v1297
      %1368 = vmatprep.subr.mxu0 0.0
      %1369 = vmatpush1.msra.mxu0 0.0
      %1370 = vmatprep.subr.mxu0 0.0
      %1371 = vmatpush1.msra.mxu0 0.0
      %1372 = vmatprep.subr.mxu0 0.0
      %1373 = vmatpush1.msra.mxu0 0.0
      %1374 = vmatprep.subr.mxu0 0.0
      %1375 = vmatpush1.msra.mxu0 0.0
      %1376 = vmatprep.subr.mxu0 0.0
      %1377 = vmatpush1.msra.mxu0 0.0
      %1378 = vmatprep.subr.mxu0 0.0
      %1379 = vmatpush1.msra.mxu0 0.0
      %1380 = vmatprep.subr.mxu0 0.0
      %1381 = vmatpush1.msra.mxu0 0.0
      %1382 = vmatprep.subr.mxu0 0.0
      %1383 = vmatpush1.msra.mxu0 0.0
      %1384 = vmatprep.subr.mxu0 0.0
      %1385 = vmatpush1.msra.mxu0 0.0
      %1386 = vmatprep.subr.mxu0 0.0
      %1387 = vmatpush1.msra.mxu0 0.0
      %1388 = vmatprep.subr.mxu0 0.0
      %1389 = vmatpush1.msra.mxu0 0.0
      %1390 = vmatprep.subr.mxu0 0.0
      %1391 = vmatpush1.msra.mxu0 0.0
      %1392 = vmatprep.subr.mxu0 0.0
      %1393 = vmatpush1.msra.mxu0 0.0
      %1394 = vmatprep.subr.mxu0 0.0
      %1395 = vmatpush1.msra.mxu0 0.0
      %1396 = vmatprep.subr.mxu0 0.0
      %1397 = vmatpush1.msra.mxu0 0.0
      %1398 = vmatprep.subr.mxu0 0.0
      %1399 = vmatpush1.msra.mxu0 0.0
      %1400 = vmatprep.subr.mxu0 0.0
      %1401 = vmatpush1.msra.mxu0 0.0
      %1402 = vmatprep.subr.mxu0 0.0
      %1403 = vmatpush1.msra.mxu0 0.0
      %1404 = vmatprep.subr.mxu0 0.0
      %1405 = vmatpush1.msra.mxu0 0.0
      %1406 = vmatprep.subr.mxu0 0.0
      %1407 = vmatpush1.msra.mxu0 0.0
      %1408 = vmatprep.subr.mxu0 0.0
      %1409 = vmatpush1.msra.mxu0 0.0
      %1410 = vmatprep.subr.mxu0 0.0
      %1411 = vmatpush1.msra.mxu0 0.0
      %1412 = vmatprep.subr.mxu0 0.0
      %1413 = vmatpush1.msra.mxu0 0.0
      %1414 = vmatprep.subr.mxu0 0.0
      %1415 = vmatpush1.msra.mxu0 0.0
      %1416 = vmatprep.mubr.f32.mxu0 0.0
      %1417 = vmatmul.mubr.f32.gmra.mrb[0].mxu0 %v1299
      %v1418 = vpop.f32.mrb[0].mxu0
      %v1419 = vadd.f32 0.0, %v1418
      %v1420 = vpop.f32.mrb[0].mxu0
      %1421 = vmatprep.mubr.f32.mxu0 0.0
      %1422 = vmatmul.mubr.f32.gmra.mrb[0].mxu0 %v1302
      %v1423 = vpop.f32.mrb[0].mxu0
      %v1424 = vadd.f32 0.0, %v1423
      %v1425 = vpop.f32.mrb[0].mxu0
      %1426 = vmatprep.mubr.f32.mxu0 0.0
      %1427 = vmatmul.mubr.f32.gmra.mrb[0].mxu0 %v1305
      %v1428 = vpop.f32.mrb[0].mxu0
      %v1429 = vadd.f32 0.0, %v1428
      %v1430 = vpop.f32.mrb[0].mxu0
      %1431 = vmatprep.mubr.f32.mxu0 0.0
      %1432 = vmatmul.mubr.f32.gmra.mrb[0].mxu0 %v1308
      %v1433 = vpop.f32.mrb[0].mxu0
      %v1434 = vadd.f32 0.0, %v1433
      %v1435 = vpop.f32.mrb[0].mxu0
      %1436 = vmatprep.mubr.f32.mxu0 0.0
      %1437 = vmatmul.mubr.f32.gmra.mrb[0].mxu0 %v1311
      %v1438 = vpop.f32.mrb[0].mxu0
      %v1439 = vadd.f32 0.0, %v1438
      %v1440 = vpop.f32.mrb[0].mxu0
      %1441 = vmatprep.mubr.f32.mxu0 0.0
      %1442 = vmatmul.mubr.f32.gmra.mrb[0].mxu0 %v1314
      %v1443 = vpop.f32.mrb[0].mxu0
      %v1444 = vadd.f32 0.0, %v1443
      %v1445 = vpop.f32.mrb[0].mxu0
      %1446 = vmatprep.mubr.f32.mxu0 0.0
      %1447 = vmatmul.mubr.f32.gmra.mrb[0].mxu0 %v1317
      %v1448 = vpop.f32.mrb[0].mxu0
      %v1449 = vadd.f32 0.0, %v1448
      %v1450 = vpop.f32.mrb[0].mxu0
      %1451 = vmatprep.mubr.f32.mxu0 0.0
      %1452 = vmatmul.mubr.f32.gmra.mrb[0].mxu0 %v1320
      %v1453 = vpop.f32.mrb[0].mxu0
      %v1454 = vadd.f32 0.0, %v1453
      %v1455 = vpop.f32.mrb[0].mxu0
      %1456 = vmatprep.mubr.f32.mxu0 0.0
      %1457 = vmatmul.mubr.f32.gmra.mrb[0].mxu0 %v1323
      %v1458 = vpop.f32.mrb[0].mxu0
      %v1459 = vadd.f32 0.0, %v1458
      %v1460 = vpop.f32.mrb[0].mxu0
      %1461 = vmatprep.mubr.f32.mxu0 0.0
      %1462 = vmatmul.mubr.f32.gmra.mrb[0].mxu0 %v1326
      %v1463 = vpop.f32.mrb[0].mxu0
      %v1464 = vadd.f32 0.0, %v1463
      %v1465 = vpop.f32.mrb[0].mxu0
      %1466 = vmatprep.mubr.f32.mxu0 0.0
      %1467 = vmatmul.mubr.f32.gmra.mrb[0].mxu0 %v1329
      %v1468 = vpop.f32.mrb[0].mxu0
      %v1469 = vadd.f32 0.0, %v1468
      %v1470 = vpop.f32.mrb[0].mxu0
      %1471 = vmatprep.mubr.f32.mxu0 0.0
      %1472 = vmatmul.mubr.f32.gmra.mrb[0].mxu0 %v1332
      %v1473 = vpop.f32.mrb[0].mxu0
      %v1474 = vadd.f32 0.0, %v1473
      %v1475 = vpop.f32.mrb[0].mxu0
      %1476 = vmatprep.mubr.f32.mxu0 0.0
      %1477 = vmatmul.mubr.f32.gmra.mrb[0].mxu0 %v1335
      %v1478 = vpop.f32.mrb[0].mxu0
      %v1479 = vadd.f32 0.0, %v1478
      %v1480 = vpop.f32.mrb[0].mxu0
      %1481 = vmatprep.mubr.f32.mxu0 0.0
      %1482 = vmatmul.mubr.f32.gmra.mrb[0].mxu0 %v1338
      %v1483 = vpop.f32.mrb[0].mxu0
      %v1484 = vadd.f32 0.0, %v1483
      %v1485 = vpop.f32.mrb[0].mxu0
      %1486 = vmatprep.mubr.f32.mxu0 0.0
      %1487 = vmatmul.mubr.f32.gmra.mrb[0].mxu0 %v1341
      %v1488 = vpop.f32.mrb[0].mxu0
      %v1489 = vadd.f32 0.0, %v1488
      %v1490 = vpop.f32.mrb[0].mxu0
      %1491 = vmatprep.mubr.f32.mxu0 0.0
      %1492 = vmatmul.mubr.f32.gmra.mrb[0].mxu0 %v1344
      %v1493 = vpop.f32.mrb[0].mxu0
      %v1494 = vadd.f32 0.0, %v1493
      %v1495 = vpop.f32.mrb[0].mxu0
      %1496 = vmatprep.mubr.f32.mxu0 0.0
      %1497 = vmatmul.mubr.f32.gmra.mrb[0].mxu0 %v1347
      %v1498 = vpop.f32.mrb[0].mxu0
      %v1499 = vadd.f32 0.0, %v1498
      %v1500 = vpop.f32.mrb[0].mxu0
      %1501 = vmatprep.mubr.f32.mxu0 0.0
      %1502 = vmatmul.mubr.f32.gmra.mrb[0].mxu0 %v1350
      %v1503 = vpop.f32.mrb[0].mxu0
      %v1504 = vadd.f32 0.0, %v1503
      %v1505 = vpop.f32.mrb[0].mxu0
      %1506 = vdwg.mxu0
      %v1507 = vld [vmem:[%s8] sm:$0xff]
      %v1508 = vld [vmem:[%s8 + $0x8] sm:$0xff]
      %v1509 = vld [vmem:[%s8 + $0x10] sm:$0xff]
      %v1510 = vld [vmem:[%s8 + $0x18] sm:$0xff]
      %v1511 = vld [vmem:[%s8 + $0x20] sm:$0xff]
      %v1512 = vld [vmem:[%s8 + $0x28] sm:$0xff]
      %v1513 = vld [vmem:[%s8 + $0x30] sm:$0xff]
      %v1514 = vld [vmem:[%s8 + $0x38] sm:$0xff]
      %v1516 = vsel %vm524, %v1272, 0
      %v1519 = vsel %vm524, %v1273, 0
      %v1522 = vsel %vm524, %v1274, 0
      %v1525 = vsel %vm524, %v1275, 0
      %v1528 = vsel %vm524, %v1276, 0
      %v1531 = vsel %vm524, %v1277, 0
      %v1534 = vsel %vm524, %v1278, 0
      %v1537 = vsel %vm524, %v1279, 0
      %v1540 = vsel %vm524, %v1280, 0
      %v1543 = vsel %vm524, %v1281, 0
      %v1546 = vsel %vm524, %v1282, 0
      %v1549 = vsel %vm524, %v1283, 0
      %v1552 = vsel %vm524, %v1284, 0
      %v1555 = vsel %vm524, %v1285, 0
      %v1558 = vsel %vm524, %v1286, 0
      %v1561 = vsel %vm524, %v1287, 0
      %v1564 = vsel %vm524, %v1288, 0
      %v1567 = vsel %vm524, %v1289, 0
      %1569 = vmatprep.subr.mxu0 0.0
      %1570 = vmatpush1.msra.mxu0 %v1507
      %1571 = vmatprep.subr.mxu0 0.0
      %1572 = vmatpush1.msra.mxu0 %v1508
      %1573 = vmatprep.subr.mxu0 0.0
      %1574 = vmatpush1.msra.mxu0 %v1509
      %1575 = vmatprep.subr.mxu0 0.0
      %1576 = vmatpush1.msra.mxu0 %v1510
      %1577 = vmatprep.subr.mxu0 0.0
      %1578 = vmatpush1.msra.mxu0 %v1511
      %1579 = vmatprep.subr.mxu0 0.0
      %1580 = vmatpush1.msra.mxu0 %v1512
      %1581 = vmatprep.subr.mxu0 0.0
      %1582 = vmatpush1.msra.mxu0 %v1513
      %1583 = vmatprep.subr.mxu0 0.0
      %1584 = vmatpush1.msra.mxu0 %v1514
      %1585 = vmatprep.subr.mxu0 0.0
      %1586 = vmatpush1.msra.mxu0 0.0
      %1587 = vmatprep.subr.mxu0 0.0
      %1588 = vmatpush1.msra.mxu0 0.0
      %1589 = vmatprep.subr.mxu0 0.0
      %1590 = vmatpush1.msra.mxu0 0.0
      %1591 = vmatprep.subr.mxu0 0.0
      %1592 = vmatpush1.msra.mxu0 0.0
      %1593 = vmatprep.subr.mxu0 0.0
      %1594 = vmatpush1.msra.mxu0 0.0
      %1595 = vmatprep.subr.mxu0 0.0
      %1596 = vmatpush1.msra.mxu0 0.0
      %1597 = vmatprep.subr.mxu0 0.0
      %1598 = vmatpush1.msra.mxu0 0.0
      %1599 = vmatprep.subr.mxu0 0.0
      %1600 = vmatpush1.msra.mxu0 0.0
      %1601 = vmatprep.subr.mxu0 0.0
      %1602 = vmatpush1.msra.mxu0 0.0
      %1603 = vmatprep.subr.mxu0 0.0
      %1604 = vmatpush1.msra.mxu0 0.0
      %1605 = vmatprep.subr.mxu0 0.0
      %1606 = vmatpush1.msra.mxu0 0.0
      %1607 = vmatprep.subr.mxu0 0.0
      %1608 = vmatpush1.msra.mxu0 0.0
      %1609 = vmatprep.subr.mxu0 0.0
      %1610 = vmatpush1.msra.mxu0 0.0
      %1611 = vmatprep.subr.mxu0 0.0
      %1612 = vmatpush1.msra.mxu0 0.0
      %1613 = vmatprep.subr.mxu0 0.0
      %1614 = vmatpush1.msra.mxu0 0.0
      %1615 = vmatprep.subr.mxu0 0.0
      %1616 = vmatpush1.msra.mxu0 0.0
      %1617 = vmatprep.subr.mxu0 0.0
      %1618 = vmatpush1.msra.mxu0 0.0
      %1619 = vmatprep.subr.mxu0 0.0
      %1620 = vmatpush1.msra.mxu0 0.0
      %1621 = vmatprep.subr.mxu0 0.0
      %1622 = vmatpush1.msra.mxu0 0.0
      %1623 = vmatprep.subr.mxu0 0.0
      %1624 = vmatpush1.msra.mxu0 0.0
      %1625 = vmatprep.subr.mxu0 0.0
      %1626 = vmatpush1.msra.mxu0 0.0
      %1627 = vmatprep.subr.mxu0 0.0
      %1628 = vmatpush1.msra.mxu0 0.0
      %1629 = vmatprep.subr.mxu0 0.0
      %1630 = vmatpush1.msra.mxu0 0.0
      %1631 = vmatprep.subr.mxu0 0.0
      %1632 = vmatpush1.msra.mxu0 0.0
      %1633 = vmatprep.mubr.f32.mxu0 0.0
      %1634 = vmatmul.mubr.f32.gmra.mrb[0].mxu0 %v1516
      %v1635 = vpop.f32.mrb[0].mxu0
      %v1636 = vadd.f32 0.0, %v1635
      %v1637 = vpop.f32.mrb[0].mxu0
      %1638 = vmatprep.mubr.f32.mxu0 0.0
      %1639 = vmatmul.mubr.f32.gmra.mrb[0].mxu0 %v1519
      %v1640 = vpop.f32.mrb[0].mxu0
      %v1641 = vadd.f32 0.0, %v1640
      %v1642 = vpop.f32.mrb[0].mxu0
      %1643 = vmatprep.mubr.f32.mxu0 0.0
      %1644 = vmatmul.mubr.f32.gmra.mrb[0].mxu0 %v1522
      %v1645 = vpop.f32.mrb[0].mxu0
      %v1646 = vadd.f32 0.0, %v1645
      %v1647 = vpop.f32.mrb[0].mxu0
      %1648 = vmatprep.mubr.f32.mxu0 0.0
      %1649 = vmatmul.mubr.f32.gmra.mrb[0].mxu0 %v1525
      %v1650 = vpop.f32.mrb[0].mxu0
      %v1651 = vadd.f32 0.0, %v1650
      %v1652 = vpop.f32.mrb[0].mxu0
      %1653 = vmatprep.mubr.f32.mxu0 0.0
      %1654 = vmatmul.mubr.f32.gmra.mrb[0].mxu0 %v1528
      %v1655 = vpop.f32.mrb[0].mxu0
      %v1656 = vadd.f32 0.0, %v1655
      %v1657 = vpop.f32.mrb[0].mxu0
      %1658 = vmatprep.mubr.f32.mxu0 0.0
      %1659 = vmatmul.mubr.f32.gmra.mrb[0].mxu0 %v1531
      %v1660 = vpop.f32.mrb[0].mxu0
      %v1661 = vadd.f32 0.0, %v1660
      %v1662 = vpop.f32.mrb[0].mxu0
      %1663 = vmatprep.mubr.f32.mxu0 0.0
      %1664 = vmatmul.mubr.f32.gmra.mrb[0].mxu0 %v1534
      %v1665 = vpop.f32.mrb[0].mxu0
      %v1666 = vadd.f32 0.0, %v1665
      %v1667 = vpop.f32.mrb[0].mxu0
      %1668 = vmatprep.mubr.f32.mxu0 0.0
      %1669 = vmatmul.mubr.f32.gmra.mrb[0].mxu0 %v1537
      %v1670 = vpop.f32.mrb[0].mxu0
      %v1671 = vadd.f32 0.0, %v1670
      %v1672 = vpop.f32.mrb[0].mxu0
      %1673 = vmatprep.mubr.f32.mxu0 0.0
      %1674 = vmatmul.mubr.f32.gmra.mrb[0].mxu0 %v1540
      %v1675 = vpop.f32.mrb[0].mxu0
      %v1676 = vadd.f32 0.0, %v1675
      %v1677 = vpop.f32.mrb[0].mxu0
      %1678 = vmatprep.mubr.f32.mxu0 0.0
      %1679 = vmatmul.mubr.f32.gmra.mrb[0].mxu0 %v1543
      %v1680 = vpop.f32.mrb[0].mxu0
      %v1681 = vadd.f32 0.0, %v1680
      %v1682 = vpop.f32.mrb[0].mxu0
      %1683 = vmatprep.mubr.f32.mxu0 0.0
      %1684 = vmatmul.mubr.f32.gmra.mrb[0].mxu0 %v1546
      %v1685 = vpop.f32.mrb[0].mxu0
      %v1686 = vadd.f32 0.0, %v1685
      %v1687 = vpop.f32.mrb[0].mxu0
      %1688 = vmatprep.mubr.f32.mxu0 0.0
      %1689 = vmatmul.mubr.f32.gmra.mrb[0].mxu0 %v1549
      %v1690 = vpop.f32.mrb[0].mxu0
      %v1691 = vadd.f32 0.0, %v1690
      %v1692 = vpop.f32.mrb[0].mxu0
      %1693 = vmatprep.mubr.f32.mxu0 0.0
      %1694 = vmatmul.mubr.f32.gmra.mrb[0].mxu0 %v1552
      %v1695 = vpop.f32.mrb[0].mxu0
      %v1696 = vadd.f32 0.0, %v1695
      %v1697 = vpop.f32.mrb[0].mxu0
      %1698 = vmatprep.mubr.f32.mxu0 0.0
      %1699 = vmatmul.mubr.f32.gmra.mrb[0].mxu0 %v1555
      %v1700 = vpop.f32.mrb[0].mxu0
      %v1701 = vadd.f32 0.0, %v1700
      %v1702 = vpop.f32.mrb[0].mxu0
      %1703 = vmatprep.mubr.f32.mxu0 0.0
      %1704 = vmatmul.mubr.f32.gmra.mrb[0].mxu0 %v1558
      %v1705 = vpop.f32.mrb[0].mxu0
      %v1706 = vadd.f32 0.0, %v1705
      %v1707 = vpop.f32.mrb[0].mxu0
      %1708 = vmatprep.mubr.f32.mxu0 0.0
      %1709 = vmatmul.mubr.f32.gmra.mrb[0].mxu0 %v1561
      %v1710 = vpop.f32.mrb[0].mxu0
      %v1711 = vadd.f32 0.0, %v1710
      %v1712 = vpop.f32.mrb[0].mxu0
      %1713 = vmatprep.mubr.f32.mxu0 0.0
      %1714 = vmatmul.mubr.f32.gmra.mrb[0].mxu0 %v1564
      %v1715 = vpop.f32.mrb[0].mxu0
      %v1716 = vadd.f32 0.0, %v1715
      %v1717 = vpop.f32.mrb[0].mxu0
      %1718 = vmatprep.mubr.f32.mxu0 0.0
      %1719 = vmatmul.mubr.f32.gmra.mrb[0].mxu0 %v1567
      %v1720 = vpop.f32.mrb[0].mxu0
      %v1721 = vadd.f32 0.0, %v1720
      %v1722 = vpop.f32.mrb[0].mxu0
      %1723 = vdwg.mxu0
      %v1724 = vadd.f32 %v1211, %v1272
      %v1725 = vadd.f32 %v1212, %v1273
      %v1726 = vadd.f32 %v1213, %v1274
      %v1727 = vadd.f32 %v1214, %v1275
      %v1728 = vadd.f32 %v1215, %v1276
      %v1729 = vadd.f32 %v1216, %v1277
      %v1730 = vadd.f32 %v1217, %v1278
      %v1731 = vadd.f32 %v1218, %v1279
      %v1732 = vadd.f32 %v1219, %v1280
      %v1733 = vadd.f32 %v1220, %v1281
      %v1734 = vadd.f32 %v1221, %v1282
      %v1735 = vadd.f32 %v1222, %v1283
      %v1736 = vadd.f32 %v1223, %v1284
      %v1737 = vadd.f32 %v1224, %v1285
      %v1738 = vadd.f32 %v1225, %v1286
      %v1739 = vadd.f32 %v1226, %v1287
      %v1740 = vadd.f32 %v1227, %v1288
      %v1741 = vadd.f32 %v1228, %v1289
      %v1742 = vld [vmem:[%s9] sm:$0xff]
      %v1743 = vld [vmem:[%s9 + $0x8] sm:$0xff]
      %v1744 = vld [vmem:[%s9 + $0x10] sm:$0xff]
      %v1745 = vld [vmem:[%s9 + $0x18] sm:$0xff]
      %v1746 = vld [vmem:[%s9 + $0x20] sm:$0xff]
      %v1747 = vld [vmem:[%s9 + $0x28] sm:$0xff]
      %v1748 = vld [vmem:[%s9 + $0x30] sm:$0xff]
      %v1749 = vld [vmem:[%s9 + $0x38] sm:$0xff]
      %v1751 = vsel %vm524, %v1724, 0
      %v1754 = vsel %vm524, %v1725, 0
      %v1757 = vsel %vm524, %v1726, 0
      %v1760 = vsel %vm524, %v1727, 0
      %v1763 = vsel %vm524, %v1728, 0
      %v1766 = vsel %vm524, %v1729, 0
      %v1769 = vsel %vm524, %v1730, 0
      %v1772 = vsel %vm524, %v1731, 0
      %v1775 = vsel %vm524, %v1732, 0
      %v1778 = vsel %vm524, %v1733, 0
      %v1781 = vsel %vm524, %v1734, 0
      %v1784 = vsel %vm524, %v1735, 0
      %v1787 = vsel %vm524, %v1736, 0
      %v1790 = vsel %vm524, %v1737, 0
      %v1793 = vsel %vm524, %v1738, 0
      %v1796 = vsel %vm524, %v1739, 0
      %v1799 = vsel %vm524, %v1740, 0
      %v1802 = vsel %vm524, %v1741, 0
      %1804 = vmatprep.subr.mxu0 0.0
      %1805 = vmatpush1.msra.mxu0 %v1742
      %1806 = vmatprep.subr.mxu0 0.0
      %1807 = vmatpush1.msra.mxu0 %v1743
      %1808 = vmatprep.subr.mxu0 0.0
      %1809 = vmatpush1.msra.mxu0 %v1744
      %1810 = vmatprep.subr.mxu0 0.0
      %1811 = vmatpush1.msra.mxu0 %v1745
      %1812 = vmatprep.subr.mxu0 0.0
      %1813 = vmatpush1.msra.mxu0 %v1746
      %1814 = vmatprep.subr.mxu0 0.0
      %1815 = vmatpush1.msra.mxu0 %v1747
      %1816 = vmatprep.subr.mxu0 0.0
      %1817 = vmatpush1.msra.mxu0 %v1748
      %1818 = vmatprep.subr.mxu0 0.0
      %1819 = vmatpush1.msra.mxu0 %v1749
      %1820 = vmatprep.subr.mxu0 0.0
      %1821 = vmatpush1.msra.mxu0 0.0
      %1822 = vmatprep.subr.mxu0 0.0
      %1823 = vmatpush1.msra.mxu0 0.0
      %1824 = vmatprep.subr.mxu0 0.0
      %1825 = vmatpush1.msra.mxu0 0.0
      %1826 = vmatprep.subr.mxu0 0.0
      %1827 = vmatpush1.msra.mxu0 0.0
      %1828 = vmatprep.subr.mxu0 0.0
      %1829 = vmatpush1.msra.mxu0 0.0
      %1830 = vmatprep.subr.mxu0 0.0
      %1831 = vmatpush1.msra.mxu0 0.0
      %1832 = vmatprep.subr.mxu0 0.0
      %1833 = vmatpush1.msra.mxu0 0.0
      %1834 = vmatprep.subr.mxu0 0.0
      %1835 = vmatpush1.msra.mxu0 0.0
      %1836 = vmatprep.subr.mxu0 0.0
      %1837 = vmatpush1.msra.mxu0 0.0
      %1838 = vmatprep.subr.mxu0 0.0
      %1839 = vmatpush1.msra.mxu0 0.0
      %1840 = vmatprep.subr.mxu0 0.0
      %1841 = vmatpush1.msra.mxu0 0.0
      %1842 = vmatprep.subr.mxu0 0.0
      %1843 = vmatpush1.msra.mxu0 0.0
      %1844 = vmatprep.subr.mxu0 0.0
      %1845 = vmatpush1.msra.mxu0 0.0
      %1846 = vmatprep.subr.mxu0 0.0
      %1847 = vmatpush1.msra.mxu0 0.0
      %1848 = vmatprep.subr.mxu0 0.0
      %1849 = vmatpush1.msra.mxu0 0.0
      %1850 = vmatprep.subr.mxu0 0.0
      %1851 = vmatpush1.msra.mxu0 0.0
      %1852 = vmatprep.subr.mxu0 0.0
      %1853 = vmatpush1.msra.mxu0 0.0
      %1854 = vmatprep.subr.mxu0 0.0
      %1855 = vmatpush1.msra.mxu0 0.0
      %1856 = vmatprep.subr.mxu0 0.0
      %1857 = vmatpush1.msra.mxu0 0.0
      %1858 = vmatprep.subr.mxu0 0.0
      %1859 = vmatpush1.msra.mxu0 0.0
      %1860 = vmatprep.subr.mxu0 0.0
      %1861 = vmatpush1.msra.mxu0 0.0
      %1862 = vmatprep.subr.mxu0 0.0
      %1863 = vmatpush1.msra.mxu0 0.0
      %1864 = vmatprep.subr.mxu0 0.0
      %1865 = vmatpush1.msra.mxu0 0.0
      %1866 = vmatprep.subr.mxu0 0.0
      %1867 = vmatpush1.msra.mxu0 0.0
      %1868 = vmatprep.mubr.f32.mxu0 0.0
      %1869 = vmatmul.mubr.f32.gmra.mrb[0].mxu0 %v1751
      %v1870 = vpop.f32.mrb[0].mxu0
      %v1871 = vadd.f32 0.0, %v1870
      %v1872 = vpop.f32.mrb[0].mxu0
      %1873 = vmatprep.mubr.f32.mxu0 0.0
      %1874 = vmatmul.mubr.f32.gmra.mrb[0].mxu0 %v1754
      %v1875 = vpop.f32.mrb[0].mxu0
      %v1876 = vadd.f32 0.0, %v1875
      %v1877 = vpop.f32.mrb[0].mxu0
      %1878 = vmatprep.mubr.f32.mxu0 0.0
      %1879 = vmatmul.mubr.f32.gmra.mrb[0].mxu0 %v1757
      %v1880 = vpop.f32.mrb[0].mxu0
      %v1881 = vadd.f32 0.0, %v1880
      %v1882 = vpop.f32.mrb[0].mxu0
      %1883 = vmatprep.mubr.f32.mxu0 0.0
      %1884 = vmatmul.mubr.f32.gmra.mrb[0].mxu0 %v1760
      %v1885 = vpop.f32.mrb[0].mxu0
      %v1886 = vadd.f32 0.0, %v1885
      %v1887 = vpop.f32.mrb[0].mxu0
      %1888 = vmatprep.mubr.f32.mxu0 0.0
      %1889 = vmatmul.mubr.f32.gmra.mrb[0].mxu0 %v1763
      %v1890 = vpop.f32.mrb[0].mxu0
      %v1891 = vadd.f32 0.0, %v1890
      %v1892 = vpop.f32.mrb[0].mxu0
      %1893 = vmatprep.mubr.f32.mxu0 0.0
      %1894 = vmatmul.mubr.f32.gmra.mrb[0].mxu0 %v1766
      %v1895 = vpop.f32.mrb[0].mxu0
      %v1896 = vadd.f32 0.0, %v1895
      %v1897 = vpop.f32.mrb[0].mxu0
      %1898 = vmatprep.mubr.f32.mxu0 0.0
      %1899 = vmatmul.mubr.f32.gmra.mrb[0].mxu0 %v1769
      %v1900 = vpop.f32.mrb[0].mxu0
      %v1901 = vadd.f32 0.0, %v1900
      %v1902 = vpop.f32.mrb[0].mxu0
      %1903 = vmatprep.mubr.f32.mxu0 0.0
      %1904 = vmatmul.mubr.f32.gmra.mrb[0].mxu0 %v1772
      %v1905 = vpop.f32.mrb[0].mxu0
      %v1906 = vadd.f32 0.0, %v1905
      %v1907 = vpop.f32.mrb[0].mxu0
      %1908 = vmatprep.mubr.f32.mxu0 0.0
      %1909 = vmatmul.mubr.f32.gmra.mrb[0].mxu0 %v1775
      %v1910 = vpop.f32.mrb[0].mxu0
      %v1911 = vadd.f32 0.0, %v1910
      %v1912 = vpop.f32.mrb[0].mxu0
      %1913 = vmatprep.mubr.f32.mxu0 0.0
      %1914 = vmatmul.mubr.f32.gmra.mrb[0].mxu0 %v1778
      %v1915 = vpop.f32.mrb[0].mxu0
      %v1916 = vadd.f32 0.0, %v1915
      %v1917 = vpop.f32.mrb[0].mxu0
      %1918 = vmatprep.mubr.f32.mxu0 0.0
      %1919 = vmatmul.mubr.f32.gmra.mrb[0].mxu0 %v1781
      %v1920 = vpop.f32.mrb[0].mxu0
      %v1921 = vadd.f32 0.0, %v1920
      %v1922 = vpop.f32.mrb[0].mxu0
      %1923 = vmatprep.mubr.f32.mxu0 0.0
      %1924 = vmatmul.mubr.f32.gmra.mrb[0].mxu0 %v1784
      %v1925 = vpop.f32.mrb[0].mxu0
      %v1926 = vadd.f32 0.0, %v1925
      %v1927 = vpop.f32.mrb[0].mxu0
      %1928 = vmatprep.mubr.f32.mxu0 0.0
      %1929 = vmatmul.mubr.f32.gmra.mrb[0].mxu0 %v1787
      %v1930 = vpop.f32.mrb[0].mxu0
      %v1931 = vadd.f32 0.0, %v1930
      %v1932 = vpop.f32.mrb[0].mxu0
      %1933 = vmatprep.mubr.f32.mxu0 0.0
      %1934 = vmatmul.mubr.f32.gmra.mrb[0].mxu0 %v1790
      %v1935 = vpop.f32.mrb[0].mxu0
      %v1936 = vadd.f32 0.0, %v1935
      %v1937 = vpop.f32.mrb[0].mxu0
      %1938 = vmatprep.mubr.f32.mxu0 0.0
      %1939 = vmatmul.mubr.f32.gmra.mrb[0].mxu0 %v1793
      %v1940 = vpop.f32.mrb[0].mxu0
      %v1941 = vadd.f32 0.0, %v1940
      %v1942 = vpop.f32.mrb[0].mxu0
      %1943 = vmatprep.mubr.f32.mxu0 0.0
      %1944 = vmatmul.mubr.f32.gmra.mrb[0].mxu0 %v1796
      %v1945 = vpop.f32.mrb[0].mxu0
      %v1946 = vadd.f32 0.0, %v1945
      %v1947 = vpop.f32.mrb[0].mxu0
      %1948 = vmatprep.mubr.f32.mxu0 0.0
      %1949 = vmatmul.mubr.f32.gmra.mrb[0].mxu0 %v1799
      %v1950 = vpop.f32.mrb[0].mxu0
      %v1951 = vadd.f32 0.0, %v1950
      %v1952 = vpop.f32.mrb[0].mxu0
      %1953 = vmatprep.mubr.f32.mxu0 0.0
      %1954 = vmatmul.mubr.f32.gmra.mrb[0].mxu0 %v1802
      %v1955 = vpop.f32.mrb[0].mxu0
      %v1956 = vadd.f32 0.0, %v1955
      %v1957 = vpop.f32.mrb[0].mxu0
      %1958 = vdwg.mxu0
      %v1959 = vsub.f32 %v1419, %v1636
      %v1960 = vsub.f32 %v1424, %v1641
      %v1961 = vsub.f32 %v1429, %v1646
      %v1962 = vsub.f32 %v1434, %v1651
      %v1963 = vsub.f32 %v1439, %v1656
      %v1964 = vsub.f32 %v1444, %v1661
      %v1965 = vsub.f32 %v1449, %v1666
      %v1966 = vsub.f32 %v1454, %v1671
      %v1967 = vsub.f32 %v1459, %v1676
      %v1968 = vsub.f32 %v1464, %v1681
      %v1969 = vsub.f32 %v1469, %v1686
      %v1970 = vsub.f32 %v1474, %v1691
      %v1971 = vsub.f32 %v1479, %v1696
      %v1972 = vsub.f32 %v1484, %v1701
      %v1973 = vsub.f32 %v1489, %v1706
      %v1974 = vsub.f32 %v1494, %v1711
      %v1975 = vsub.f32 %v1499, %v1716
      %v1976 = vsub.f32 %v1504, %v1721
      %v1977 = vld [vmem:[%s10] sm:$0x1]
      %v1979 = vlaneseq
      %v1980 = vshrl.u32 %v1979, 7
      %v1981 = vsub.s32 0, %v1980
      %v1982 = vrot.slane %v1977, %v1981
      %v1984 = vadd.f32 %v1959, %v1982
      %v1985 = vadd.f32 %v1960, %v1982
      %v1986 = vadd.f32 %v1961, %v1982
      %v1987 = vadd.f32 %v1962, %v1982
      %v1988 = vadd.f32 %v1963, %v1982
      %v1989 = vadd.f32 %v1964, %v1982
      %v1990 = vadd.f32 %v1965, %v1982
      %v1991 = vadd.f32 %v1966, %v1982
      %v1992 = vadd.f32 %v1967, %v1982
      %v1993 = vadd.f32 %v1968, %v1982
      %v1994 = vadd.f32 %v1969, %v1982
      %v1995 = vadd.f32 %v1970, %v1982
      %v1996 = vadd.f32 %v1971, %v1982
      %v1997 = vadd.f32 %v1972, %v1982
      %v1998 = vadd.f32 %v1973, %v1982
      %v1999 = vadd.f32 %v1974, %v1982
      %v2000 = vadd.f32 %v1975, %v1982
      %v2001 = vadd.f32 %v1976, %v1982
      %v2002 = vsub.f32 %v1871, %v1419
      %v2003 = vsub.f32 %v1876, %v1424
      %v2004 = vsub.f32 %v1881, %v1429
      %v2005 = vsub.f32 %v1886, %v1434
      %v2006 = vsub.f32 %v1891, %v1439
      %v2007 = vsub.f32 %v1896, %v1444
      %v2008 = vsub.f32 %v1901, %v1449
      %v2009 = vsub.f32 %v1906, %v1454
      %v2010 = vsub.f32 %v1911, %v1459
      %v2011 = vsub.f32 %v1916, %v1464
      %v2012 = vsub.f32 %v1921, %v1469
      %v2013 = vsub.f32 %v1926, %v1474
      %v2014 = vsub.f32 %v1931, %v1479
      %v2015 = vsub.f32 %v1936, %v1484
      %v2016 = vsub.f32 %v1941, %v1489
      %v2017 = vsub.f32 %v1946, %v1494
      %v2018 = vsub.f32 %v1951, %v1499
      %v2019 = vsub.f32 %v1956, %v1504
      %v2020 = vsub.f32 %v2002, %v1636
      %v2021 = vsub.f32 %v2003, %v1641
      %v2022 = vsub.f32 %v2004, %v1646
      %v2023 = vsub.f32 %v2005, %v1651
      %v2024 = vsub.f32 %v2006, %v1656
      %v2025 = vsub.f32 %v2007, %v1661
      %v2026 = vsub.f32 %v2008, %v1666
      %v2027 = vsub.f32 %v2009, %v1671
      %v2028 = vsub.f32 %v2010, %v1676
      %v2029 = vsub.f32 %v2011, %v1681
      %v2030 = vsub.f32 %v2012, %v1686
      %v2031 = vsub.f32 %v2013, %v1691
      %v2032 = vsub.f32 %v2014, %v1696
      %v2033 = vsub.f32 %v2015, %v1701
      %v2034 = vsub.f32 %v2016, %v1706
      %v2035 = vsub.f32 %v2017, %v1711
      %v2036 = vsub.f32 %v2018, %v1716
      %v2037 = vsub.f32 %v2019, %v1721
      %v2038 = vld [vmem:[%s11] sm:$0x1]
      %v2040 = vlaneseq
      %v2041 = vshrl.u32 %v2040, 7
      %v2042 = vsub.s32 0, %v2041
      %v2043 = vrot.slane %v2038, %v2042
      %v2045 = vadd.f32 %v2020, %v2043
      %v2046 = vadd.f32 %v2021, %v2043
      %v2047 = vadd.f32 %v2022, %v2043
      %v2048 = vadd.f32 %v2023, %v2043
      %v2049 = vadd.f32 %v2024, %v2043
      %v2050 = vadd.f32 %v2025, %v2043
      %v2051 = vadd.f32 %v2026, %v2043
      %v2052 = vadd.f32 %v2027, %v2043
      %v2053 = vadd.f32 %v2028, %v2043
      %v2054 = vadd.f32 %v2029, %v2043
      %v2055 = vadd.f32 %v2030, %v2043
      %v2056 = vadd.f32 %v2031, %v2043
      %v2057 = vadd.f32 %v2032, %v2043
      %v2058 = vadd.f32 %v2033, %v2043
      %v2059 = vadd.f32 %v2034, %v2043
      %v2060 = vadd.f32 %v2035, %v2043
      %v2061 = vadd.f32 %v2036, %v2043
      %v2062 = vadd.f32 %v2037, %v2043
      %v2063 = vsub.f32 %v1984, 0.01
      %v2064 = vsub.f32 %v1985, 0.01
      %v2065 = vsub.f32 %v1986, 0.01
      %v2066 = vsub.f32 %v1987, 0.01
      %v2067 = vsub.f32 %v1988, 0.01
      %v2068 = vsub.f32 %v1989, 0.01
      %v2069 = vsub.f32 %v1990, 0.01
      %v2070 = vsub.f32 %v1991, 0.01
      %v2071 = vsub.f32 %v1992, 0.01
      %v2072 = vsub.f32 %v1993, 0.01
      %v2073 = vsub.f32 %v1994, 0.01
      %v2074 = vsub.f32 %v1995, 0.01
      %v2075 = vsub.f32 %v1996, 0.01
      %v2076 = vsub.f32 %v1997, 0.01
      %v2077 = vsub.f32 %v1998, 0.01
      %v2078 = vsub.f32 %v1999, 0.01
      %v2079 = vsub.f32 %v2000, 0.01
      %v2080 = vsub.f32 %v2001, 0.01
      %v2081 = vmax.f32 %v2063, 0.0
      %v2082 = vmax.f32 %v2064, 0.0
      %v2083 = vmax.f32 %v2065, 0.0
      %v2084 = vmax.f32 %v2066, 0.0
      %v2085 = vmax.f32 %v2067, 0.0
      %v2086 = vmax.f32 %v2068, 0.0
      %v2087 = vmax.f32 %v2069, 0.0
      %v2088 = vmax.f32 %v2070, 0.0
      %v2089 = vmax.f32 %v2071, 0.0
      %v2090 = vmax.f32 %v2072, 0.0
      %v2091 = vmax.f32 %v2073, 0.0
      %v2092 = vmax.f32 %v2074, 0.0
      %v2093 = vmax.f32 %v2075, 0.0
      %v2094 = vmax.f32 %v2076, 0.0
      %v2095 = vmax.f32 %v2077, 0.0
      %v2096 = vmax.f32 %v2078, 0.0
      %v2097 = vmax.f32 %v2079, 0.0
      %v2098 = vmax.f32 %v2080, 0.0
      %v2099 = vadd.f32 %v1984, 0.01
      %v2100 = vadd.f32 %v1985, 0.01
      %v2101 = vadd.f32 %v1986, 0.01
      %v2102 = vadd.f32 %v1987, 0.01
      %v2103 = vadd.f32 %v1988, 0.01
      %v2104 = vadd.f32 %v1989, 0.01
      %v2105 = vadd.f32 %v1990, 0.01
      %v2106 = vadd.f32 %v1991, 0.01
      %v2107 = vadd.f32 %v1992, 0.01
      %v2108 = vadd.f32 %v1993, 0.01
      %v2109 = vadd.f32 %v1994, 0.01
      %v2110 = vadd.f32 %v1995, 0.01
      %v2111 = vadd.f32 %v1996, 0.01
      %v2112 = vadd.f32 %v1997, 0.01
      %v2113 = vadd.f32 %v1998, 0.01
      %v2114 = vadd.f32 %v1999, 0.01
      %v2115 = vadd.f32 %v2000, 0.01
      %v2116 = vadd.f32 %v2001, 0.01
      %v2117 = vmin.f32 %v2099, 0.0
      %v2118 = vmin.f32 %v2100, 0.0
      %v2119 = vmin.f32 %v2101, 0.0
      %v2120 = vmin.f32 %v2102, 0.0
      %v2121 = vmin.f32 %v2103, 0.0
      %v2122 = vmin.f32 %v2104, 0.0
      %v2123 = vmin.f32 %v2105, 0.0
      %v2124 = vmin.f32 %v2106, 0.0
      %v2125 = vmin.f32 %v2107, 0.0
      %v2126 = vmin.f32 %v2108, 0.0
      %v2127 = vmin.f32 %v2109, 0.0
      %v2128 = vmin.f32 %v2110, 0.0
      %v2129 = vmin.f32 %v2111, 0.0
      %v2130 = vmin.f32 %v2112, 0.0
      %v2131 = vmin.f32 %v2113, 0.0
      %v2132 = vmin.f32 %v2114, 0.0
      %v2133 = vmin.f32 %v2115, 0.0
      %v2134 = vmin.f32 %v2116, 0.0
      %v2135 = vadd.f32 %v2081, %v2117
      %v2136 = vadd.f32 %v2082, %v2118
      %v2137 = vadd.f32 %v2083, %v2119
      %v2138 = vadd.f32 %v2084, %v2120
      %v2139 = vadd.f32 %v2085, %v2121
      %v2140 = vadd.f32 %v2086, %v2122
      %v2141 = vadd.f32 %v2087, %v2123
      %v2142 = vadd.f32 %v2088, %v2124
      %v2143 = vadd.f32 %v2089, %v2125
      %v2144 = vadd.f32 %v2090, %v2126
      %v2145 = vadd.f32 %v2091, %v2127
      %v2146 = vadd.f32 %v2092, %v2128
      %v2147 = vadd.f32 %v2093, %v2129
      %v2148 = vadd.f32 %v2094, %v2130
      %v2149 = vadd.f32 %v2095, %v2131
      %v2150 = vadd.f32 %v2096, %v2132
      %v2151 = vadd.f32 %v2097, %v2133
      %v2152 = vadd.f32 %v2098, %v2134
      %v2153 = vsub.f32 %v2045, 0.01
      %v2154 = vsub.f32 %v2046, 0.01
      %v2155 = vsub.f32 %v2047, 0.01
      %v2156 = vsub.f32 %v2048, 0.01
      %v2157 = vsub.f32 %v2049, 0.01
      %v2158 = vsub.f32 %v2050, 0.01
      %v2159 = vsub.f32 %v2051, 0.01
      %v2160 = vsub.f32 %v2052, 0.01
      %v2161 = vsub.f32 %v2053, 0.01
      %v2162 = vsub.f32 %v2054, 0.01
      %v2163 = vsub.f32 %v2055, 0.01
      %v2164 = vsub.f32 %v2056, 0.01
      %v2165 = vsub.f32 %v2057, 0.01
      %v2166 = vsub.f32 %v2058, 0.01
      %v2167 = vsub.f32 %v2059, 0.01
      %v2168 = vsub.f32 %v2060, 0.01
      %v2169 = vsub.f32 %v2061, 0.01
      %v2170 = vsub.f32 %v2062, 0.01
      %v2171 = vmax.f32 %v2153, 0.0
      %v2172 = vmax.f32 %v2154, 0.0
      %v2173 = vmax.f32 %v2155, 0.0
      %v2174 = vmax.f32 %v2156, 0.0
      %v2175 = vmax.f32 %v2157, 0.0
      %v2176 = vmax.f32 %v2158, 0.0
      %v2177 = vmax.f32 %v2159, 0.0
      %v2178 = vmax.f32 %v2160, 0.0
      %v2179 = vmax.f32 %v2161, 0.0
      %v2180 = vmax.f32 %v2162, 0.0
      %v2181 = vmax.f32 %v2163, 0.0
      %v2182 = vmax.f32 %v2164, 0.0
      %v2183 = vmax.f32 %v2165, 0.0
      %v2184 = vmax.f32 %v2166, 0.0
      %v2185 = vmax.f32 %v2167, 0.0
      %v2186 = vmax.f32 %v2168, 0.0
      %v2187 = vmax.f32 %v2169, 0.0
      %v2188 = vmax.f32 %v2170, 0.0
      %v2189 = vadd.f32 %v2045, 0.01
      %v2190 = vadd.f32 %v2046, 0.01
      %v2191 = vadd.f32 %v2047, 0.01
      %v2192 = vadd.f32 %v2048, 0.01
      %v2193 = vadd.f32 %v2049, 0.01
      %v2194 = vadd.f32 %v2050, 0.01
      %v2195 = vadd.f32 %v2051, 0.01
      %v2196 = vadd.f32 %v2052, 0.01
      %v2197 = vadd.f32 %v2053, 0.01
      %v2198 = vadd.f32 %v2054, 0.01
      %v2199 = vadd.f32 %v2055, 0.01
      %v2200 = vadd.f32 %v2056, 0.01
      %v2201 = vadd.f32 %v2057, 0.01
      %v2202 = vadd.f32 %v2058, 0.01
      %v2203 = vadd.f32 %v2059, 0.01
      %v2204 = vadd.f32 %v2060, 0.01
      %v2205 = vadd.f32 %v2061, 0.01
      %v2206 = vadd.f32 %v2062, 0.01
      %v2207 = vmin.f32 %v2189, 0.0
      %v2208 = vmin.f32 %v2190, 0.0
      %v2209 = vmin.f32 %v2191, 0.0
      %v2210 = vmin.f32 %v2192, 0.0
      %v2211 = vmin.f32 %v2193, 0.0
      %v2212 = vmin.f32 %v2194, 0.0
      %v2213 = vmin.f32 %v2195, 0.0
      %v2214 = vmin.f32 %v2196, 0.0
      %v2215 = vmin.f32 %v2197, 0.0
      %v2216 = vmin.f32 %v2198, 0.0
      %v2217 = vmin.f32 %v2199, 0.0
      %v2218 = vmin.f32 %v2200, 0.0
      %v2219 = vmin.f32 %v2201, 0.0
      %v2220 = vmin.f32 %v2202, 0.0
      %v2221 = vmin.f32 %v2203, 0.0
      %v2222 = vmin.f32 %v2204, 0.0
      %v2223 = vmin.f32 %v2205, 0.0
      %v2224 = vmin.f32 %v2206, 0.0
      %v2225 = vadd.f32 %v2171, %v2207
      %v2226 = vadd.f32 %v2172, %v2208
      %v2227 = vadd.f32 %v2173, %v2209
      %v2228 = vadd.f32 %v2174, %v2210
      %v2229 = vadd.f32 %v2175, %v2211
      %v2230 = vadd.f32 %v2176, %v2212
      %v2231 = vadd.f32 %v2177, %v2213
      %v2232 = vadd.f32 %v2178, %v2214
      %v2233 = vadd.f32 %v2179, %v2215
      %v2234 = vadd.f32 %v2180, %v2216
      %v2235 = vadd.f32 %v2181, %v2217
      %v2236 = vadd.f32 %v2182, %v2218
      %v2237 = vadd.f32 %v2183, %v2219
      %v2238 = vadd.f32 %v2184, %v2220
      %v2239 = vadd.f32 %v2185, %v2221
      %v2240 = vadd.f32 %v2186, %v2222
      %v2241 = vadd.f32 %v2187, %v2223
      %v2242 = vadd.f32 %v2188, %v2224
      %v2243 = vmul.f32 %v2135, %v480
      %v2244 = vmul.f32 %v2136, %v481
      %v2245 = vmul.f32 %v2137, %v482
      %v2246 = vmul.f32 %v2138, %v483
      %v2247 = vmul.f32 %v2139, %v484
      %v2248 = vmul.f32 %v2140, %v485
      %v2249 = vmul.f32 %v2141, %v486
      %v2250 = vmul.f32 %v2142, %v487
      %v2251 = vmul.f32 %v2143, %v488
      %v2252 = vmul.f32 %v2144, %v489
      %v2253 = vmul.f32 %v2145, %v490
      %v2254 = vmul.f32 %v2146, %v491
      %v2255 = vmul.f32 %v2147, %v492
      %v2256 = vmul.f32 %v2148, %v493
      %v2257 = vmul.f32 %v2149, %v494
      %v2258 = vmul.f32 %v2150, %v495
      %v2259 = vmul.f32 %v2151, %v496
      %v2260 = vmul.f32 %v2152, %v497
      %v2261 = vmul.f32 %v2225, %v498
      %v2262 = vmul.f32 %v2226, %v499
      %v2263 = vmul.f32 %v2227, %v500
      %v2264 = vmul.f32 %v2228, %v501
      %v2265 = vmul.f32 %v2229, %v502
      %v2266 = vmul.f32 %v2230, %v503
      %v2267 = vmul.f32 %v2231, %v504
      %v2268 = vmul.f32 %v2232, %v505
      %v2269 = vmul.f32 %v2233, %v506
      %v2270 = vmul.f32 %v2234, %v507
      %v2271 = vmul.f32 %v2235, %v508
      %v2272 = vmul.f32 %v2236, %v509
      %v2273 = vmul.f32 %v2237, %v510
      %v2274 = vmul.f32 %v2238, %v511
      %v2275 = vmul.f32 %v2239, %v512
      %v2276 = vmul.f32 %v2240, %v513
      %v2277 = vmul.f32 %v2241, %v514
      %v2278 = vmul.f32 %v2242, %v515
      %v2279 = vsub.f32 %v2243, %v2261
      %v2280 = vsub.f32 %v2244, %v2262
      %v2281 = vsub.f32 %v2245, %v2263
      %v2282 = vsub.f32 %v2246, %v2264
      %v2283 = vsub.f32 %v2247, %v2265
      %v2284 = vsub.f32 %v2248, %v2266
      %v2285 = vsub.f32 %v2249, %v2267
      %v2286 = vsub.f32 %v2250, %v2268
      %v2287 = vsub.f32 %v2251, %v2269
      %v2288 = vsub.f32 %v2252, %v2270
      %v2289 = vsub.f32 %v2253, %v2271
      %v2290 = vsub.f32 %v2254, %v2272
      %v2291 = vsub.f32 %v2255, %v2273
      %v2292 = vsub.f32 %v2256, %v2274
      %v2293 = vsub.f32 %v2257, %v2275
      %v2294 = vsub.f32 %v2258, %v2276
      %v2295 = vsub.f32 %v2259, %v2277
      %v2296 = vsub.f32 %v2260, %v2278
      %2297 = vst.msk [vmem:[%s472] sm:$0xff] %vm524, %v2279
      %2298 = vst.msk [vmem:[%s472 + $0x8] sm:$0xff] %vm524, %v2280
      %2299 = vst.msk [vmem:[%s472 + $0x10] sm:$0xff] %vm524, %v2281
      %2300 = vst.msk [vmem:[%s472 + $0x18] sm:$0xff] %vm524, %v2282
      %2301 = vst.msk [vmem:[%s472 + $0x20] sm:$0xff] %vm524, %v2283
      %2302 = vst.msk [vmem:[%s472 + $0x28] sm:$0xff] %vm524, %v2284
      %2303 = vst.msk [vmem:[%s472 + $0x30] sm:$0xff] %vm524, %v2285
      %2304 = vst.msk [vmem:[%s472 + $0x38] sm:$0xff] %vm524, %v2286
      %2305 = vst.msk [vmem:[%s472 + $0x40] sm:$0xff] %vm524, %v2287
      %2306 = vst.msk [vmem:[%s472 + $0x48] sm:$0xff] %vm524, %v2288
      %2307 = vst.msk [vmem:[%s472 + $0x50] sm:$0xff] %vm524, %v2289
      %2308 = vst.msk [vmem:[%s472 + $0x58] sm:$0xff] %vm524, %v2290
      %2309 = vst.msk [vmem:[%s472 + $0x60] sm:$0xff] %vm524, %v2291
      %2310 = vst.msk [vmem:[%s472 + $0x68] sm:$0xff] %vm524, %v2292
      %2311 = vst.msk [vmem:[%s472 + $0x70] sm:$0xff] %vm524, %v2293
      %2312 = vst.msk [vmem:[%s472 + $0x78] sm:$0xff] %vm524, %v2294
      %2313 = vst.msk [vmem:[%s472 + $0x80] sm:$0xff] %vm524, %v2295
      %2314 = vst.msk [vmem:[%s472 + $0x88] sm:$0xff] %vm524, %v2296
      %v2315 = vmul.f32 %v2135, %v498
      %v2316 = vmul.f32 %v2136, %v499
      %v2317 = vmul.f32 %v2137, %v500
      %v2318 = vmul.f32 %v2138, %v501
      %v2319 = vmul.f32 %v2139, %v502
      %v2320 = vmul.f32 %v2140, %v503
      %v2321 = vmul.f32 %v2141, %v504
      %v2322 = vmul.f32 %v2142, %v505
      %v2323 = vmul.f32 %v2143, %v506
      %v2324 = vmul.f32 %v2144, %v507
      %v2325 = vmul.f32 %v2145, %v508
      %v2326 = vmul.f32 %v2146, %v509
      %v2327 = vmul.f32 %v2147, %v510
      %v2328 = vmul.f32 %v2148, %v511
      %v2329 = vmul.f32 %v2149, %v512
      %v2330 = vmul.f32 %v2150, %v513
      %v2331 = vmul.f32 %v2151, %v514
      %v2332 = vmul.f32 %v2152, %v515
      %v2333 = vmul.f32 %v2225, %v480
      %v2334 = vmul.f32 %v2226, %v481
      %v2335 = vmul.f32 %v2227, %v482
      %v2336 = vmul.f32 %v2228, %v483
      %v2337 = vmul.f32 %v2229, %v484
      %v2338 = vmul.f32 %v2230, %v485
      %v2339 = vmul.f32 %v2231, %v486
      %v2340 = vmul.f32 %v2232, %v487
      %v2341 = vmul.f32 %v2233, %v488
      %v2342 = vmul.f32 %v2234, %v489
      %v2343 = vmul.f32 %v2235, %v490
      %v2344 = vmul.f32 %v2236, %v491
      %v2345 = vmul.f32 %v2237, %v492
      %v2346 = vmul.f32 %v2238, %v493
      %v2347 = vmul.f32 %v2239, %v494
      %v2348 = vmul.f32 %v2240, %v495
      %v2349 = vmul.f32 %v2241, %v496
      %v2350 = vmul.f32 %v2242, %v497
      %v2351 = vadd.f32 %v2315, %v2333
      %v2352 = vadd.f32 %v2316, %v2334
      %v2353 = vadd.f32 %v2317, %v2335
      %v2354 = vadd.f32 %v2318, %v2336
      %v2355 = vadd.f32 %v2319, %v2337
      %v2356 = vadd.f32 %v2320, %v2338
      %v2357 = vadd.f32 %v2321, %v2339
      %v2358 = vadd.f32 %v2322, %v2340
      %v2359 = vadd.f32 %v2323, %v2341
      %v2360 = vadd.f32 %v2324, %v2342
      %v2361 = vadd.f32 %v2325, %v2343
      %v2362 = vadd.f32 %v2326, %v2344
      %v2363 = vadd.f32 %v2327, %v2345
      %v2364 = vadd.f32 %v2328, %v2346
      %v2365 = vadd.f32 %v2329, %v2347
      %v2366 = vadd.f32 %v2330, %v2348
      %v2367 = vadd.f32 %v2331, %v2349
      %v2368 = vadd.f32 %v2332, %v2350
      %2369 = vst.msk [vmem:[%s478] sm:$0xff] %vm524, %v2351
      %2370 = vst.msk [vmem:[%s478 + $0x8] sm:$0xff] %vm524, %v2352
      %2371 = vst.msk [vmem:[%s478 + $0x10] sm:$0xff] %vm524, %v2353
      %2372 = vst.msk [vmem:[%s478 + $0x18] sm:$0xff] %vm524, %v2354
      %2373 = vst.msk [vmem:[%s478 + $0x20] sm:$0xff] %vm524, %v2355
      %2374 = vst.msk [vmem:[%s478 + $0x28] sm:$0xff] %vm524, %v2356
      %2375 = vst.msk [vmem:[%s478 + $0x30] sm:$0xff] %vm524, %v2357
      %2376 = vst.msk [vmem:[%s478 + $0x38] sm:$0xff] %vm524, %v2358
      %2377 = vst.msk [vmem:[%s478 + $0x40] sm:$0xff] %vm524, %v2359
      %2378 = vst.msk [vmem:[%s478 + $0x48] sm:$0xff] %vm524, %v2360
      %2379 = vst.msk [vmem:[%s478 + $0x50] sm:$0xff] %vm524, %v2361
      %2380 = vst.msk [vmem:[%s478 + $0x58] sm:$0xff] %vm524, %v2362
      %2381 = vst.msk [vmem:[%s478 + $0x60] sm:$0xff] %vm524, %v2363
      %2382 = vst.msk [vmem:[%s478 + $0x68] sm:$0xff] %vm524, %v2364
      %2383 = vst.msk [vmem:[%s478 + $0x70] sm:$0xff] %vm524, %v2365
      %2384 = vst.msk [vmem:[%s478 + $0x78] sm:$0xff] %vm524, %v2366
      %2385 = vst.msk [vmem:[%s478 + $0x80] sm:$0xff] %vm524, %v2367
      %2386 = vst.msk [vmem:[%s478 + $0x88] sm:$0xff] %vm524, %v2368
      %s2387 = smul.u32 18, %s25
      %p2388 = scmp.lt.s32.totalorder %s2387, 35
      %s2389 = scalar_select %p2388, %s2387, 35
      %s2390 = smul.addr %s2389, 8
      %s2391 = scalar_lea.vmem %s12, %s2390
      %s2392 = smul.u32 18, %s25
      %p2393 = scmp.lt.s32.totalorder %s2392, 35
      %s2394 = scalar_select %p2393, %s2392, 35
      %s2395 = smul.addr %s2394, 8
      %s2396 = scalar_lea.vmem %s13, %s2395
      // Predicated region
      $region69: #{tpu_custom_call.1} parent=67 // pred_check
        %p2397 = pneg %p305
      $region70: #{tpu_custom_call.1} parent=67 // pred_check_branch
        %2399 = sbr.rel (%p2397) target = $region72
      $region71: #{tpu_custom_call.1} parent=67 // pred_region
        %s2400 = smul.u32 18, %s25
      $region72: #{tpu_custom_call.1} parent=67 // pred_fallthru
        _
      // Predicated region
      $region73: #{tpu_custom_call.1} parent=67 // pred_check
        %p2401 = pneg %p331
      $region74: #{tpu_custom_call.1} parent=67 // pred_check_branch
        %2403 = sbr.rel (%p2401) target = $region76
      $region75: #{tpu_custom_call.1} parent=67 // pred_region
        %s2404 = smul.u32 18, %s25
      $region76: #{tpu_custom_call.1} parent=67 // pred_fallthru
        _
    $region68: #{tpu_custom_call.1} parent=5 // pred_fallthru
      _
    %p2405 = scmp.le.s32.totalorder 2, %s20
    // Predicated region
    $region77: #{tpu_custom_call.1} parent=5 // pred_check
      %p2406 = pneg %p2405
    $region78: #{tpu_custom_call.1} parent=5 // pred_check_branch
      %2408 = sbr.rel (%p2406) target = $region80
    $region79: #{tpu_custom_call.1} parent=5 // pred_region
      %s2409 = ssub.s32 %s20, 2
      // Predicated region
      $region81: #{tpu_custom_call.1} parent=79 // pred_check
        %p2410 = pneg %p311
      $region82: #{tpu_custom_call.1} parent=79 // pred_check_branch
        %2412 = sbr.rel (%p2410) target = $region84
      $region83: #{tpu_custom_call.1} parent=79 // pred_region
        %s2413 = smul.u32 18, %s26
        %p2414 = scmp.lt.s32.totalorder %s2413, 35
        %s2415 = scalar_select %p2414, %s2413, 35
        %s2416 = smul.addr %s2415, 8
        %s2417 = scalar_lea.vmem %s12, %s2416
      $region84: #{tpu_custom_call.1} parent=79 // pred_fallthru
        _
      // Predicated region
      $region85: #{tpu_custom_call.1} parent=79 // pred_check
        %p2418 = pneg %p337
      $region86: #{tpu_custom_call.1} parent=79 // pred_check_branch
        %2420 = sbr.rel (%p2418) target = $region88
      $region87: #{tpu_custom_call.1} parent=79 // pred_region
        %s2421 = smul.u32 18, %s26
        %p2422 = scmp.lt.s32.totalorder %s2421, 35
        %s2423 = scalar_select %p2422, %s2421, 35
        %s2424 = smul.addr %s2423, 8
        %s2425 = scalar_lea.vmem %s13, %s2424
      $region88: #{tpu_custom_call.1} parent=79 // pred_fallthru
        _
    $region80: #{tpu_custom_call.1} parent=5 // pred_fallthru
      _
  $region6: #{tpu_custom_call.1} parent=0 // loop_footer
    %s24 = sadd.s32 1, %s20
  $region7: #{tpu_custom_call.1} parent=0 // loop_footer_branch
    %19 = sbr.rel target = $region3
  $region8: #{tpu_custom_call.1} parent=0 // loop_exit
    _

</llo_original>
